<compile_context>
chip_gen: v6e
topology: v6e:2x2x1
jax: 0.10.0
libtpu: 0.0.40
codegen_flags: <defaults>
</compile_context>

<pallas_src>
import math

import jax
import jax.numpy as jnp
from jax.experimental import pallas as pl
from jax.experimental.pallas import tpu as pltpu


# ----------------------------------------------------------------------------
# Shared LSTM cell (expects i/f/o pre-activation columns already scaled by 0.5)
# ----------------------------------------------------------------------------
def _lstm_cell(gates, c_prev, H, *, first=False):
    """PyTorch gate order (i, f, g, o); sigmoid(x) = 0.5 + 0.5 * tanh(x/2)."""
    th = jnp.tanh(gates)                       # single full-width EUP pass
    i_g = 0.5 * th[:, 0 * H:1 * H] + 0.5
    g_g = th[:, 2 * H:3 * H]
    o_g = 0.5 * th[:, 3 * H:4 * H] + 0.5
    if first:                                  # c_prev == 0
        c_new = i_g * g_g
    else:
        f_g = 0.5 * th[:, 1 * H:2 * H] + 0.5
        c_new = f_g * c_prev + i_g * g_g
    h_new = o_g * jnp.tanh(c_new)
    return h_new, c_new


# ----------------------------------------------------------------------------
# Specialized kernel for num_layers == 2 (wavefront / diagonal fusion)
# ----------------------------------------------------------------------------
def make_fused2_kernel(seq_length, hidden):
    H = hidden

    def kernel(x_ref, w_ih0_ref, b0_ref, w_fused_ref, b1_ref, out_ref):
        B = x_ref.shape[0]

        w_fused = w_fused_ref[...]             # (2H, 8H)
        w_top = w_fused[:H, :]                 # (H, 8H)  = [W_ih1_t | W_hh0_t]
        w_l1 = w_fused[:, :4 * H]              # (2H, 4H) layer-1 columns only
        b1 = jnp.broadcast_to(b1_ref[...], (B, 4 * H))   # hoisted broadcast

        # Hoisted layer-0 input projection: latent is constant over t.
        xproj0 = (
            jnp.dot(x_ref[...], w_ih0_ref[...], preferred_element_type=jnp.float32)
            + b0_ref[...]
        )

        outs = []

        # ---- t = 0 (h = c = 0): no recurrent contributions ----
        h0, c0 = _lstm_cell(xproj0, None, H, first=True)
        if seq_length > 1:
            # one dot -> layer-1(0) gates AND layer-0(1) recurrent part
            fused = jnp.dot(h0, w_top, preferred_element_type=jnp.float32)  # (B, 8H)
            gates1 = fused[:, :4 * H] + b1
            rec0 = fused[:, 4 * H:]
        else:
            gates1 = jnp.dot(h0, w_top[:, :4 * H],
                             preferred_element_type=jnp.float32) + b1
        h1, c1 = _lstm_cell(gates1, None, H, first=True)
        outs.append(h1)

        # ---- t = 1 .. T-2: ONE (B,2H)@(2H,8H) dot per step ----
        for _t in range(1, seq_length - 1):
            gates0 = xproj0 + rec0
            h0, c0 = _lstm_cell(gates0, c0, H)
            cat = jnp.concatenate([h0, h1], axis=-1)       # (B, 2H)
            fused = jnp.dot(cat, w_fused, preferred_element_type=jnp.float32)
            gates1 = fused[:, :4 * H] + b1
            rec0 = fused[:, 4 * H:]
            h1, c1 = _lstm_cell(gates1, c1, H)
            outs.append(h1)

        # ---- t = T-1: next-step recurrent columns not needed ----
        if seq_length > 1:
            gates0 = xproj0 + rec0
            h0, c0 = _lstm_cell(gates0, c0, H)
            cat = jnp.concatenate([h0, h1], axis=-1)
            gates1 = jnp.dot(cat, w_l1, preferred_element_type=jnp.float32) + b1
            h1, c1 = _lstm_cell(gates1, c1, H)
            outs.append(h1)

        # Single lane-dense store: (B, T*H) — 256 lanes wide at test shapes.
        out_ref[...] = jnp.concatenate(outs, axis=-1)

    return kernel


# ----------------------------------------------------------------------------
# General kernel for arbitrary num_layers (no wavefront fusion)
# ----------------------------------------------------------------------------
def make_general_kernel(num_layers, seq_length, hidden):
    H = hidden

    def kernel(*refs):
        x_ref = refs[0]
        w_ih0_ref, w_hh0_ref, b0_ref = refs[1], refs[2], refs[3]
        rest = refs[4:4 + 3 * (num_layers - 1)]
        out_ref = refs[4 + 3 * (num_layers - 1)]
        B = x_ref.shape[0]

        w_hh0 = w_hh0_ref[...]
        w_ihs = [rest[3 * i][...] for i in range(num_layers - 1)]
        w_hhs = [rest[3 * i + 1][...] for i in range(num_layers - 1)]
        bs = [jnp.broadcast_to(rest[3 * i + 2][...], (B, 4 * H))
              for i in range(num_layers - 1)]

        xproj0 = (
            jnp.dot(x_ref[...], w_ih0_ref[...], preferred_element_type=jnp.float32)
            + b0_ref[...]
        )

        h = [None] * num_layers
        c = [None] * num_layers
        outs = []
        for t in range(seq_length):
            first = (t == 0)
            if first:
                gates = xproj0
            else:
                gates = xproj0 + jnp.dot(h[0], w_hh0,
                                         preferred_element_type=jnp.float32)
            h[0], c[0] = _lstm_cell(gates, c[0], H, first=first)
            inp = h[0]
            for l in range(1, num_layers):
                # two independent dots (avoids a possibly-materializing concat)
                gates = jnp.dot(inp, w_ihs[l - 1],
                                preferred_element_type=jnp.float32) + bs[l - 1]
                if not first:
                    gates = gates + jnp.dot(h[l], w_hhs[l - 1],
                                            preferred_element_type=jnp.float32)
                h[l], c[l] = _lstm_cell(gates, c[l], H, first=first)
                inp = h[l]
            outs.append(inp)

        out_ref[...] = jnp.concatenate(outs, axis=-1)

    return kernel


# ----------------------------------------------------------------------------
# Wrapper: parameter packing + pallas_call
# ----------------------------------------------------------------------------
def _scale_ifo(w, H):
    """Scale the i/f/o gate columns (blocks 0, 1, 3 of the 4H axis) by 0.5."""
    scale = jnp.concatenate([
        jnp.full((H,), 0.5, w.dtype),
        jnp.full((H,), 0.5, w.dtype),
        jnp.ones((H,), w.dtype),
        jnp.full((H,), 0.5, w.dtype),
    ])
    return w * scale


def decoder_forward(x, params, *, num_layers, seq_length, hidden):
    """x: (B, latent_dim) float32. Returns (B, seq_length, hidden) float32."""
    B = x.shape[0]
    H = hidden
    vmem_spec = pl.BlockSpec(memory_space=pltpu.MemorySpace.VMEM)

    w_ih0, w_hh0, b_ih0, b_hh0 = params[0]
    w_ih0_t = _scale_ifo(jnp.transpose(w_ih0), H)          # (latent, 4H)
    w_hh0_t = _scale_ifo(jnp.transpose(w_hh0), H)          # (H, 4H)
    b0 = _scale_ifo((b_ih0 + b_hh0)[None, :], H)           # (1, 4H)

    if num_layers == 2:
        w_ih1, w_hh1, b_ih1, b_hh1 = params[1]
        w_ih1_t = _scale_ifo(jnp.transpose(w_ih1), H)      # (H, 4H)
        w_hh1_t = _scale_ifo(jnp.transpose(w_hh1), H)      # (H, 4H)
        b1 = _scale_ifo((b_ih1 + b_hh1)[None, :], H)       # (1, 4H)
        # Fused RHS: cols [0,4H) -> layer-1 gates; cols [4H,8H) -> layer-0 recur.
        w_fused = jnp.concatenate([
            jnp.concatenate([w_ih1_t, w_hh0_t], axis=1),
            jnp.concatenate([w_hh1_t, jnp.zeros_like(w_hh1_t)], axis=1),
        ], axis=0)                                          # (2H, 8H)
        kernel = make_fused2_kernel(seq_length, H)
        args = (x, w_ih0_t, b0, w_fused, b1)
    else:
        flat = [w_ih0_t, w_hh0_t, b0]
        for l in range(1, num_layers):
            w_ih, w_hh, b_ih, b_hh = params[l]
            flat += [_scale_ifo(jnp.transpose(w_ih), H),
                     _scale_ifo(jnp.transpose(w_hh), H),
                     _scale_ifo((b_ih + b_hh)[None, :], H)]
        kernel = make_general_kernel(num_layers, seq_length, H)
        args = (x, *flat)

    out = pl.pallas_call(
        kernel,
        out_shape=jax.ShapeDtypeStruct((B, seq_length * H), jnp.float32),
        in_specs=[vmem_spec] * len(args),
        out_specs=vmem_spec,
    )(*args)

    # (B, T*H) -> (B, T, H): same row-major layout, free reshape.
    return out.reshape(B, seq_length, H)


# ----------------------------------------------------------------------------
# Parameter init + pure-JAX reference (for the correctness check)
# ----------------------------------------------------------------------------
def init_lstm_params(key, latent_dim, hidden, num_layers):
    """PyTorch nn.LSTM shapes; uniform(-k, k), k = 1/sqrt(H)."""
    k = 1.0 / math.sqrt(hidden)
    params = []
    for l in range(num_layers):
        in_dim = latent_dim if l == 0 else hidden
        key, k1, k2, k3, k4 = jax.random.split(key, 5)
        w_ih = jax.random.uniform(k1, (4 * hidden, in_dim), jnp.float32, -k, k)
        w_hh = jax.random.uniform(k2, (4 * hidden, hidden), jnp.float32, -k, k)
        b_ih = jax.random.uniform(k3, (4 * hidden,), jnp.float32, -k, k)
        b_hh = jax.random.uniform(k4, (4 * hidden,), jnp.float32, -k, k)
        params.append((w_ih, w_hh, b_ih, b_hh))
    return params


def decoder_reference(x, params, *, num_layers, seq_length, hidden):
    B = x.shape[0]
    h = [jnp.zeros((B, hidden), jnp.float32) for _ in range(num_layers)]
    c = [jnp.zeros((B, hidden), jnp.float32) for _ in range(num_layers)]
    outs = []
    for _ in range(seq_length):
        inp = x
        for l in range(num_layers):
            w_ih, w_hh, b_ih, b_hh = params[l]
            gates = inp @ w_ih.T + b_ih + h[l] @ w_hh.T + b_hh
            i_g = jax.nn.sigmoid(gates[:, 0 * hidden:1 * hidden])
            f_g = jax.nn.sigmoid(gates[:, 1 * hidden:2 * hidden])
            g_g = jnp.tanh(gates[:, 2 * hidden:3 * hidden])
            o_g = jax.nn.sigmoid(gates[:, 3 * hidden:4 * hidden])
            c[l] = f_g * c[l] + i_g * g_g
            h[l] = o_g * jnp.tanh(c[l])
            inp = h[l]
        outs.append(inp)
    return jnp.stack(outs, axis=1)


if __name__ == "__main__":
    batch = 8
    latent_dim = 32   # LSTM input size
    input_dim = 32    # LSTM hidden size (== output feature dim)
    num_layers = 2
    seq_length = 8

    key = jax.random.PRNGKey(0)
    key, kx, kp = jax.random.split(key, 3)
    x = jax.random.normal(kx, (batch, latent_dim), dtype=jnp.float32)
    params = init_lstm_params(kp, latent_dim, input_dim, num_layers)

    out = decoder_forward(
        x, params, num_layers=num_layers, seq_length=seq_length, hidden=input_dim
    )
    out = jax.block_until_ready(out)
    assert out.shape == (batch, seq_length, input_dim), out.shape

    ref = decoder_reference(
        x, params, num_layers=num_layers, seq_length=seq_length, hidden=input_dim
    )
    ref = jax.block_until_ready(ref)
    assert jnp.allclose(out, ref, rtol=1e-3, atol=1e-3), float(jnp.max(jnp.abs(out - ref)))

    print("KERNEL_OK")
</pallas_src>

<mosaic_0001>
module attributes {stable_mosaic.version = 11 : i64} {
  func.func @kernel(%arg0: memref<8x32xf32, #tpu.memory_space<vmem>>, %arg1: memref<32x128xf32, #tpu.memory_space<vmem>>, %arg2: memref<1x128xf32, #tpu.memory_space<vmem>>, %arg3: memref<64x256xf32, #tpu.memory_space<vmem>>, %arg4: memref<1x128xf32, #tpu.memory_space<vmem>>, %arg5: memref<8x256xf32, #tpu.memory_space<vmem>>) attributes {dimension_semantics = [], scalar_prefetch = 0 : i64, scratch_operands = 0 : i64, tpu.core_type = #tpu.core_type<tc>} {
    %c0 = arith.constant 0 : index
    %c0_0 = arith.constant 0 : index
    %0 = vector.load %arg3[%c0, %c0_0] : memref<64x256xf32, #tpu.memory_space<vmem>>, vector<64x256xf32>
    %1 = vector.extract_strided_slice %0 {offsets = [0, 0], sizes = [32, 256], strides = [1, 1]} : vector<64x256xf32> to vector<32x256xf32>
    %2 = vector.extract_strided_slice %0 {offsets = [0, 0], sizes = [64, 128], strides = [1, 1]} : vector<64x256xf32> to vector<64x128xf32>
    %c0_1 = arith.constant 0 : index
    %c0_2 = arith.constant 0 : index
    %3 = vector.load %arg4[%c0_1, %c0_2] : memref<1x128xf32, #tpu.memory_space<vmem>>, vector<1x128xf32>
    %4 = vector.shape_cast %3 : vector<1x128xf32> to vector<1x128xf32>
    %5 = vector.broadcast %4 : vector<1x128xf32> to vector<8x128xf32>
    %c0_3 = arith.constant 0 : index
    %c0_4 = arith.constant 0 : index
    %6 = vector.load %arg0[%c0_3, %c0_4] : memref<8x32xf32, #tpu.memory_space<vmem>>, vector<8x32xf32>
    %c0_5 = arith.constant 0 : index
    %c0_6 = arith.constant 0 : index
    %7 = vector.load %arg1[%c0_5, %c0_6] : memref<32x128xf32, #tpu.memory_space<vmem>>, vector<32x128xf32>
    %cst = arith.constant dense<0.000000e+00> : vector<8x128xf32>
    %8 = tpu.matmul %6, %7, %cst {dimension_numbers = #tpu.dot_dimension_numbers<[1], [0], [0], [1], [0, 0, 1, 1], [], []>} : vector<8x32xf32>, vector<32x128xf32>, vector<8x128xf32> -> vector<8x128xf32>
    %c0_7 = arith.constant 0 : index
    %c0_8 = arith.constant 0 : index
    %9 = vector.load %arg2[%c0_7, %c0_8] : memref<1x128xf32, #tpu.memory_space<vmem>>, vector<1x128xf32>
    %10 = vector.broadcast %9 : vector<1x128xf32> to vector<8x128xf32>
    %11 = arith.addf %8, %10 : vector<8x128xf32>
    %12 = math.tanh %11 : vector<8x128xf32>
    %13 = vector.extract_strided_slice %12 {offsets = [0, 0], sizes = [8, 32], strides = [1, 1]} : vector<8x128xf32> to vector<8x32xf32>
    %cst_9 = arith.constant 5.000000e-01 : f32
    %14 = vector.broadcast %cst_9 : f32 to vector<8x32xf32>
    %15 = arith.mulf %14, %13 : vector<8x32xf32>
    %cst_10 = arith.constant 5.000000e-01 : f32
    %16 = vector.broadcast %cst_10 : f32 to vector<8x32xf32>
    %17 = arith.addf %15, %16 : vector<8x32xf32>
    %18 = vector.extract_strided_slice %12 {offsets = [0, 64], sizes = [8, 32], strides = [1, 1]} : vector<8x128xf32> to vector<8x32xf32>
    %19 = vector.extract_strided_slice %12 {offsets = [0, 96], sizes = [8, 32], strides = [1, 1]} : vector<8x128xf32> to vector<8x32xf32>
    %cst_11 = arith.constant 5.000000e-01 : f32
    %20 = vector.broadcast %cst_11 : f32 to vector<8x32xf32>
    %21 = arith.mulf %20, %19 : vector<8x32xf32>
    %cst_12 = arith.constant 5.000000e-01 : f32
    %22 = vector.broadcast %cst_12 : f32 to vector<8x32xf32>
    %23 = arith.addf %21, %22 : vector<8x32xf32>
    %24 = arith.mulf %17, %18 : vector<8x32xf32>
    %25 = math.tanh %24 : vector<8x32xf32>
    %26 = arith.mulf %23, %25 : vector<8x32xf32>
    %cst_13 = arith.constant dense<0.000000e+00> : vector<8x256xf32>
    %27 = tpu.matmul %26, %1, %cst_13 {dimension_numbers = #tpu.dot_dimension_numbers<[1], [0], [0], [1], [0, 0, 1, 1], [], []>} : vector<8x32xf32>, vector<32x256xf32>, vector<8x256xf32> -> vector<8x256xf32>
    %28 = vector.extract_strided_slice %27 {offsets = [0, 0], sizes = [8, 128], strides = [1, 1]} : vector<8x256xf32> to vector<8x128xf32>
    %29 = arith.addf %28, %5 : vector<8x128xf32>
    %30 = vector.extract_strided_slice %27 {offsets = [0, 128], sizes = [8, 128], strides = [1, 1]} : vector<8x256xf32> to vector<8x128xf32>
    %31 = math.tanh %29 : vector<8x128xf32>
    %32 = vector.extract_strided_slice %31 {offsets = [0, 0], sizes = [8, 32], strides = [1, 1]} : vector<8x128xf32> to vector<8x32xf32>
    %cst_14 = arith.constant 5.000000e-01 : f32
    %33 = vector.broadcast %cst_14 : f32 to vector<8x32xf32>
    %34 = arith.mulf %33, %32 : vector<8x32xf32>
    %cst_15 = arith.constant 5.000000e-01 : f32
    %35 = vector.broadcast %cst_15 : f32 to vector<8x32xf32>
    %36 = arith.addf %34, %35 : vector<8x32xf32>
    %37 = vector.extract_strided_slice %31 {offsets = [0, 64], sizes = [8, 32], strides = [1, 1]} : vector<8x128xf32> to vector<8x32xf32>
    %38 = vector.extract_strided_slice %31 {offsets = [0, 96], sizes = [8, 32], strides = [1, 1]} : vector<8x128xf32> to vector<8x32xf32>
    %cst_16 = arith.constant 5.000000e-01 : f32
    %39 = vector.broadcast %cst_16 : f32 to vector<8x32xf32>
    %40 = arith.mulf %39, %38 : vector<8x32xf32>
    %cst_17 = arith.constant 5.000000e-01 : f32
    %41 = vector.broadcast %cst_17 : f32 to vector<8x32xf32>
    %42 = arith.addf %40, %41 : vector<8x32xf32>
    %43 = arith.mulf %36, %37 : vector<8x32xf32>
    %44 = math.tanh %43 : vector<8x32xf32>
    %45 = arith.mulf %42, %44 : vector<8x32xf32>
    %46 = arith.addf %11, %30 : vector<8x128xf32>
    %47 = math.tanh %46 : vector<8x128xf32>
    %48 = vector.extract_strided_slice %47 {offsets = [0, 0], sizes = [8, 32], strides = [1, 1]} : vector<8x128xf32> to vector<8x32xf32>
    %cst_18 = arith.constant 5.000000e-01 : f32
    %49 = vector.broadcast %cst_18 : f32 to vector<8x32xf32>
    %50 = arith.mulf %49, %48 : vector<8x32xf32>
    %cst_19 = arith.constant 5.000000e-01 : f32
    %51 = vector.broadcast %cst_19 : f32 to vector<8x32xf32>
    %52 = arith.addf %50, %51 : vector<8x32xf32>
    %53 = vector.extract_strided_slice %47 {offsets = [0, 64], sizes = [8, 32], strides = [1, 1]} : vector<8x128xf32> to vector<8x32xf32>
    %54 = vector.extract_strided_slice %47 {offsets = [0, 96], sizes = [8, 32], strides = [1, 1]} : vector<8x128xf32> to vector<8x32xf32>
    %cst_20 = arith.constant 5.000000e-01 : f32
    %55 = vector.broadcast %cst_20 : f32 to vector<8x32xf32>
    %56 = arith.mulf %55, %54 : vector<8x32xf32>
    %cst_21 = arith.constant 5.000000e-01 : f32
    %57 = vector.broadcast %cst_21 : f32 to vector<8x32xf32>
    %58 = arith.addf %56, %57 : vector<8x32xf32>
    %59 = vector.extract_strided_slice %47 {offsets = [0, 32], sizes = [8, 32], strides = [1, 1]} : vector<8x128xf32> to vector<8x32xf32>
    %cst_22 = arith.constant 5.000000e-01 : f32
    %60 = vector.broadcast %cst_22 : f32 to vector<8x32xf32>
    %61 = arith.mulf %60, %59 : vector<8x32xf32>
    %cst_23 = arith.constant 5.000000e-01 : f32
    %62 = vector.broadcast %cst_23 : f32 to vector<8x32xf32>
    %63 = arith.addf %61, %62 : vector<8x32xf32>
    %64 = arith.mulf %63, %24 : vector<8x32xf32>
    %65 = arith.mulf %52, %53 : vector<8x32xf32>
    %66 = arith.addf %64, %65 : vector<8x32xf32>
    %67 = math.tanh %66 : vector<8x32xf32>
    %68 = arith.mulf %58, %67 : vector<8x32xf32>
    %69 = tpu.concatenate %68, %45 in 1 : vector<8x32xf32>, vector<8x32xf32> -> vector<8x64xf32>
    %cst_24 = arith.constant dense<0.000000e+00> : vector<8x256xf32>
    %70 = tpu.matmul %69, %0, %cst_24 {dimension_numbers = #tpu.dot_dimension_numbers<[1], [0], [0], [1], [0, 0, 1, 1], [], []>} : vector<8x64xf32>, vector<64x256xf32>, vector<8x256xf32> -> vector<8x256xf32>
    %71 = vector.extract_strided_slice %70 {offsets = [0, 0], sizes = [8, 128], strides = [1, 1]} : vector<8x256xf32> to vector<8x128xf32>
    %72 = arith.addf %71, %5 : vector<8x128xf32>
    %73 = vector.extract_strided_slice %70 {offsets = [0, 128], sizes = [8, 128], strides = [1, 1]} : vector<8x256xf32> to vector<8x128xf32>
    %74 = math.tanh %72 : vector<8x128xf32>
    %75 = vector.extract_strided_slice %74 {offsets = [0, 0], sizes = [8, 32], strides = [1, 1]} : vector<8x128xf32> to vector<8x32xf32>
    %cst_25 = arith.constant 5.000000e-01 : f32
    %76 = vector.broadcast %cst_25 : f32 to vector<8x32xf32>
    %77 = arith.mulf %76, %75 : vector<8x32xf32>
    %cst_26 = arith.constant 5.000000e-01 : f32
    %78 = vector.broadcast %cst_26 : f32 to vector<8x32xf32>
    %79 = arith.addf %77, %78 : vector<8x32xf32>
    %80 = vector.extract_strided_slice %74 {offsets = [0, 64], sizes = [8, 32], strides = [1, 1]} : vector<8x128xf32> to vector<8x32xf32>
    %81 = vector.extract_strided_slice %74 {offsets = [0, 96], sizes = [8, 32], strides = [1, 1]} : vector<8x128xf32> to vector<8x32xf32>
    %cst_27 = arith.constant 5.000000e-01 : f32
    %82 = vector.broadcast %cst_27 : f32 to vector<8x32xf32>
    %83 = arith.mulf %82, %81 : vector<8x32xf32>
    %cst_28 = arith.constant 5.000000e-01 : f32
    %84 = vector.broadcast %cst_28 : f32 to vector<8x32xf32>
    %85 = arith.addf %83, %84 : vector<8x32xf32>
    %86 = vector.extract_strided_slice %74 {offsets = [0, 32], sizes = [8, 32], strides = [1, 1]} : vector<8x128xf32> to vector<8x32xf32>
    %cst_29 = arith.constant 5.000000e-01 : f32
    %87 = vector.broadcast %cst_29 : f32 to vector<8x32xf32>
    %88 = arith.mulf %87, %86 : vector<8x32xf32>
    %cst_30 = arith.constant 5.000000e-01 : f32
    %89 = vector.broadcast %cst_30 : f32 to vector<8x32xf32>
    %90 = arith.addf %88, %89 : vector<8x32xf32>
    %91 = arith.mulf %90, %43 : vector<8x32xf32>
    %92 = arith.mulf %79, %80 : vector<8x32xf32>
    %93 = arith.addf %91, %92 : vector<8x32xf32>
    %94 = math.tanh %93 : vector<8x32xf32>
    %95 = arith.mulf %85, %94 : vector<8x32xf32>
    %96 = arith.addf %11, %73 : vector<8x128xf32>
    %97 = math.tanh %96 : vector<8x128xf32>
    %98 = vector.extract_strided_slice %97 {offsets = [0, 0], sizes = [8, 32], strides = [1, 1]} : vector<8x128xf32> to vector<8x32xf32>
    %cst_31 = arith.constant 5.000000e-01 : f32
    %99 = vector.broadcast %cst_31 : f32 to vector<8x32xf32>
    %100 = arith.mulf %99, %98 : vector<8x32xf32>
    %cst_32 = arith.constant 5.000000e-01 : f32
    %101 = vector.broadcast %cst_32 : f32 to vector<8x32xf32>
    %102 = arith.addf %100, %101 : vector<8x32xf32>
    %103 = vector.extract_strided_slice %97 {offsets = [0, 64], sizes = [8, 32], strides = [1, 1]} : vector<8x128xf32> to vector<8x32xf32>
    %104 = vector.extract_strided_slice %97 {offsets = [0, 96], sizes = [8, 32], strides = [1, 1]} : vector<8x128xf32> to vector<8x32xf32>
    %cst_33 = arith.constant 5.000000e-01 : f32
    %105 = vector.broadcast %cst_33 : f32 to vector<8x32xf32>
    %106 = arith.mulf %105, %104 : vector<8x32xf32>
    %cst_34 = arith.constant 5.000000e-01 : f32
    %107 = vector.broadcast %cst_34 : f32 to vector<8x32xf32>
    %108 = arith.addf %106, %107 : vector<8x32xf32>
    %109 = vector.extract_strided_slice %97 {offsets = [0, 32], sizes = [8, 32], strides = [1, 1]} : vector<8x128xf32> to vector<8x32xf32>
    %cst_35 = arith.constant 5.000000e-01 : f32
    %110 = vector.broadcast %cst_35 : f32 to vector<8x32xf32>
    %111 = arith.mulf %110, %109 : vector<8x32xf32>
    %cst_36 = arith.constant 5.000000e-01 : f32
    %112 = vector.broadcast %cst_36 : f32 to vector<8x32xf32>
    %113 = arith.addf %111, %112 : vector<8x32xf32>
    %114 = arith.mulf %113, %66 : vector<8x32xf32>
    %115 = arith.mulf %102, %103 : vector<8x32xf32>
    %116 = arith.addf %114, %115 : vector<8x32xf32>
    %117 = math.tanh %116 : vector<8x32xf32>
    %118 = arith.mulf %108, %117 : vector<8x32xf32>
    %119 = tpu.concatenate %118, %95 in 1 : vector<8x32xf32>, vector<8x32xf32> -> vector<8x64xf32>
    %cst_37 = arith.constant dense<0.000000e+00> : vector<8x256xf32>
    %120 = tpu.matmul %119, %0, %cst_37 {dimension_numbers = #tpu.dot_dimension_numbers<[1], [0], [0], [1], [0, 0, 1, 1], [], []>} : vector<8x64xf32>, vector<64x256xf32>, vector<8x256xf32> -> vector<8x256xf32>
    %121 = vector.extract_strided_slice %120 {offsets = [0, 0], sizes = [8, 128], strides = [1, 1]} : vector<8x256xf32> to vector<8x128xf32>
    %122 = arith.addf %121, %5 : vector<8x128xf32>
    %123 = vector.extract_strided_slice %120 {offsets = [0, 128], sizes = [8, 128], strides = [1, 1]} : vector<8x256xf32> to vector<8x128xf32>
    %124 = math.tanh %122 : vector<8x128xf32>
    %125 = vector.extract_strided_slice %124 {offsets = [0, 0], sizes = [8, 32], strides = [1, 1]} : vector<8x128xf32> to vector<8x32xf32>
    %cst_38 = arith.constant 5.000000e-01 : f32
    %126 = vector.broadcast %cst_38 : f32 to vector<8x32xf32>
    %127 = arith.mulf %126, %125 : vector<8x32xf32>
    %cst_39 = arith.constant 5.000000e-01 : f32
    %128 = vector.broadcast %cst_39 : f32 to vector<8x32xf32>
    %129 = arith.addf %127, %128 : vector<8x32xf32>
    %130 = vector.extract_strided_slice %124 {offsets = [0, 64], sizes = [8, 32], strides = [1, 1]} : vector<8x128xf32> to vector<8x32xf32>
    %131 = vector.extract_strided_slice %124 {offsets = [0, 96], sizes = [8, 32], strides = [1, 1]} : vector<8x128xf32> to vector<8x32xf32>
    %cst_40 = arith.constant 5.000000e-01 : f32
    %132 = vector.broadcast %cst_40 : f32 to vector<8x32xf32>
    %133 = arith.mulf %132, %131 : vector<8x32xf32>
    %cst_41 = arith.constant 5.000000e-01 : f32
    %134 = vector.broadcast %cst_41 : f32 to vector<8x32xf32>
    %135 = arith.addf %133, %134 : vector<8x32xf32>
    %136 = vector.extract_strided_slice %124 {offsets = [0, 32], sizes = [8, 32], strides = [1, 1]} : vector<8x128xf32> to vector<8x32xf32>
    %cst_42 = arith.constant 5.000000e-01 : f32
    %137 = vector.broadcast %cst_42 : f32 to vector<8x32xf32>
    %138 = arith.mulf %137, %136 : vector<8x32xf32>
    %cst_43 = arith.constant 5.000000e-01 : f32
    %139 = vector.broadcast %cst_43 : f32 to vector<8x32xf32>
    %140 = arith.addf %138, %139 : vector<8x32xf32>
    %141 = arith.mulf %140, %93 : vector<8x32xf32>
    %142 = arith.mulf %129, %130 : vector<8x32xf32>
    %143 = arith.addf %141, %142 : vector<8x32xf32>
    %144 = math.tanh %143 : vector<8x32xf32>
    %145 = arith.mulf %135, %144 : vector<8x32xf32>
    %146 = arith.addf %11, %123 : vector<8x128xf32>
    %147 = math.tanh %146 : vector<8x128xf32>
    %148 = vector.extract_strided_slice %147 {offsets = [0, 0], sizes = [8, 32], strides = [1, 1]} : vector<8x128xf32> to vector<8x32xf32>
    %cst_44 = arith.constant 5.000000e-01 : f32
    %149 = vector.broadcast %cst_44 : f32 to vector<8x32xf32>
    %150 = arith.mulf %149, %148 : vector<8x32xf32>
    %cst_45 = arith.constant 5.000000e-01 : f32
    %151 = vector.broadcast %cst_45 : f32 to vector<8x32xf32>
    %152 = arith.addf %150, %151 : vector<8x32xf32>
    %153 = vector.extract_strided_slice %147 {offsets = [0, 64], sizes = [8, 32], strides = [1, 1]} : vector<8x128xf32> to vector<8x32xf32>
    %154 = vector.extract_strided_slice %147 {offsets = [0, 96], sizes = [8, 32], strides = [1, 1]} : vector<8x128xf32> to vector<8x32xf32>
    %cst_46 = arith.constant 5.000000e-01 : f32
    %155 = vector.broadcast %cst_46 : f32 to vector<8x32xf32>
    %156 = arith.mulf %155, %154 : vector<8x32xf32>
    %cst_47 = arith.constant 5.000000e-01 : f32
    %157 = vector.broadcast %cst_47 : f32 to vector<8x32xf32>
    %158 = arith.addf %156, %157 : vector<8x32xf32>
    %159 = vector.extract_strided_slice %147 {offsets = [0, 32], sizes = [8, 32], strides = [1, 1]} : vector<8x128xf32> to vector<8x32xf32>
    %cst_48 = arith.constant 5.000000e-01 : f32
    %160 = vector.broadcast %cst_48 : f32 to vector<8x32xf32>
    %161 = arith.mulf %160, %159 : vector<8x32xf32>
    %cst_49 = arith.constant 5.000000e-01 : f32
    %162 = vector.broadcast %cst_49 : f32 to vector<8x32xf32>
    %163 = arith.addf %161, %162 : vector<8x32xf32>
    %164 = arith.mulf %163, %116 : vector<8x32xf32>
    %165 = arith.mulf %152, %153 : vector<8x32xf32>
    %166 = arith.addf %164, %165 : vector<8x32xf32>
    %167 = math.tanh %166 : vector<8x32xf32>
    %168 = arith.mulf %158, %167 : vector<8x32xf32>
    %169 = tpu.concatenate %168, %145 in 1 : vector<8x32xf32>, vector<8x32xf32> -> vector<8x64xf32>
    %cst_50 = arith.constant dense<0.000000e+00> : vector<8x256xf32>
    %170 = tpu.matmul %169, %0, %cst_50 {dimension_numbers = #tpu.dot_dimension_numbers<[1], [0], [0], [1], [0, 0, 1, 1], [], []>} : vector<8x64xf32>, vector<64x256xf32>, vector<8x256xf32> -> vector<8x256xf32>
    %171 = vector.extract_strided_slice %170 {offsets = [0, 0], sizes = [8, 128], strides = [1, 1]} : vector<8x256xf32> to vector<8x128xf32>
    %172 = arith.addf %171, %5 : vector<8x128xf32>
    %173 = vector.extract_strided_slice %170 {offsets = [0, 128], sizes = [8, 128], strides = [1, 1]} : vector<8x256xf32> to vector<8x128xf32>
    %174 = math.tanh %172 : vector<8x128xf32>
    %175 = vector.extract_strided_slice %174 {offsets = [0, 0], sizes = [8, 32], strides = [1, 1]} : vector<8x128xf32> to vector<8x32xf32>
    %cst_51 = arith.constant 5.000000e-01 : f32
    %176 = vector.broadcast %cst_51 : f32 to vector<8x32xf32>
    %177 = arith.mulf %176, %175 : vector<8x32xf32>
    %cst_52 = arith.constant 5.000000e-01 : f32
    %178 = vector.broadcast %cst_52 : f32 to vector<8x32xf32>
    %179 = arith.addf %177, %178 : vector<8x32xf32>
    %180 = vector.extract_strided_slice %174 {offsets = [0, 64], sizes = [8, 32], strides = [1, 1]} : vector<8x128xf32> to vector<8x32xf32>
    %181 = vector.extract_strided_slice %174 {offsets = [0, 96], sizes = [8, 32], strides = [1, 1]} : vector<8x128xf32> to vector<8x32xf32>
    %cst_53 = arith.constant 5.000000e-01 : f32
    %182 = vector.broadcast %cst_53 : f32 to vector<8x32xf32>
    %183 = arith.mulf %182, %181 : vector<8x32xf32>
    %cst_54 = arith.constant 5.000000e-01 : f32
    %184 = vector.broadcast %cst_54 : f32 to vector<8x32xf32>
    %185 = arith.addf %183, %184 : vector<8x32xf32>
    %186 = vector.extract_strided_slice %174 {offsets = [0, 32], sizes = [8, 32], strides = [1, 1]} : vector<8x128xf32> to vector<8x32xf32>
    %cst_55 = arith.constant 5.000000e-01 : f32
    %187 = vector.broadcast %cst_55 : f32 to vector<8x32xf32>
    %188 = arith.mulf %187, %186 : vector<8x32xf32>
    %cst_56 = arith.constant 5.000000e-01 : f32
    %189 = vector.broadcast %cst_56 : f32 to vector<8x32xf32>
    %190 = arith.addf %188, %189 : vector<8x32xf32>
    %191 = arith.mulf %190, %143 : vector<8x32xf32>
    %192 = arith.mulf %179, %180 : vector<8x32xf32>
    %193 = arith.addf %191, %192 : vector<8x32xf32>
    %194 = math.tanh %193 : vector<8x32xf32>
    %195 = arith.mulf %185, %194 : vector<8x32xf32>
    %196 = arith.addf %11, %173 : vector<8x128xf32>
    %197 = math.tanh %196 : vector<8x128xf32>
    %198 = vector.extract_strided_slice %197 {offsets = [0, 0], sizes = [8, 32], strides = [1, 1]} : vector<8x128xf32> to vector<8x32xf32>
    %cst_57 = arith.constant 5.000000e-01 : f32
    %199 = vector.broadcast %cst_57 : f32 to vector<8x32xf32>
    %200 = arith.mulf %199, %198 : vector<8x32xf32>
    %cst_58 = arith.constant 5.000000e-01 : f32
    %201 = vector.broadcast %cst_58 : f32 to vector<8x32xf32>
    %202 = arith.addf %200, %201 : vector<8x32xf32>
    %203 = vector.extract_strided_slice %197 {offsets = [0, 64], sizes = [8, 32], strides = [1, 1]} : vector<8x128xf32> to vector<8x32xf32>
    %204 = vector.extract_strided_slice %197 {offsets = [0, 96], sizes = [8, 32], strides = [1, 1]} : vector<8x128xf32> to vector<8x32xf32>
    %cst_59 = arith.constant 5.000000e-01 : f32
    %205 = vector.broadcast %cst_59 : f32 to vector<8x32xf32>
    %206 = arith.mulf %205, %204 : vector<8x32xf32>
    %cst_60 = arith.constant 5.000000e-01 : f32
    %207 = vector.broadcast %cst_60 : f32 to vector<8x32xf32>
    %208 = arith.addf %206, %207 : vector<8x32xf32>
    %209 = vector.extract_strided_slice %197 {offsets = [0, 32], sizes = [8, 32], strides = [1, 1]} : vector<8x128xf32> to vector<8x32xf32>
    %cst_61 = arith.constant 5.000000e-01 : f32
    %210 = vector.broadcast %cst_61 : f32 to vector<8x32xf32>
    %211 = arith.mulf %210, %209 : vector<8x32xf32>
    %cst_62 = arith.constant 5.000000e-01 : f32
    %212 = vector.broadcast %cst_62 : f32 to vector<8x32xf32>
    %213 = arith.addf %211, %212 : vector<8x32xf32>
    %214 = arith.mulf %213, %166 : vector<8x32xf32>
    %215 = arith.mulf %202, %203 : vector<8x32xf32>
    %216 = arith.addf %214, %215 : vector<8x32xf32>
    %217 = math.tanh %216 : vector<8x32xf32>
    %218 = arith.mulf %208, %217 : vector<8x32xf32>
    %219 = tpu.concatenate %218, %195 in 1 : vector<8x32xf32>, vector<8x32xf32> -> vector<8x64xf32>
    %cst_63 = arith.constant dense<0.000000e+00> : vector<8x256xf32>
    %220 = tpu.matmul %219, %0, %cst_63 {dimension_numbers = #tpu.dot_dimension_numbers<[1], [0], [0], [1], [0, 0, 1, 1], [], []>} : vector<8x64xf32>, vector<64x256xf32>, vector<8x256xf32> -> vector<8x256xf32>
    %221 = vector.extract_strided_slice %220 {offsets = [0, 0], sizes = [8, 128], strides = [1, 1]} : vector<8x256xf32> to vector<8x128xf32>
    %222 = arith.addf %221, %5 : vector<8x128xf32>
    %223 = vector.extract_strided_slice %220 {offsets = [0, 128], sizes = [8, 128], strides = [1, 1]} : vector<8x256xf32> to vector<8x128xf32>
    %224 = math.tanh %222 : vector<8x128xf32>
    %225 = vector.extract_strided_slice %224 {offsets = [0, 0], sizes = [8, 32], strides = [1, 1]} : vector<8x128xf32> to vector<8x32xf32>
    %cst_64 = arith.constant 5.000000e-01 : f32
    %226 = vector.broadcast %cst_64 : f32 to vector<8x32xf32>
    %227 = arith.mulf %226, %225 : vector<8x32xf32>
    %cst_65 = arith.constant 5.000000e-01 : f32
    %228 = vector.broadcast %cst_65 : f32 to vector<8x32xf32>
    %229 = arith.addf %227, %228 : vector<8x32xf32>
    %230 = vector.extract_strided_slice %224 {offsets = [0, 64], sizes = [8, 32], strides = [1, 1]} : vector<8x128xf32> to vector<8x32xf32>
    %231 = vector.extract_strided_slice %224 {offsets = [0, 96], sizes = [8, 32], strides = [1, 1]} : vector<8x128xf32> to vector<8x32xf32>
    %cst_66 = arith.constant 5.000000e-01 : f32
    %232 = vector.broadcast %cst_66 : f32 to vector<8x32xf32>
    %233 = arith.mulf %232, %231 : vector<8x32xf32>
    %cst_67 = arith.constant 5.000000e-01 : f32
    %234 = vector.broadcast %cst_67 : f32 to vector<8x32xf32>
    %235 = arith.addf %233, %234 : vector<8x32xf32>
    %236 = vector.extract_strided_slice %224 {offsets = [0, 32], sizes = [8, 32], strides = [1, 1]} : vector<8x128xf32> to vector<8x32xf32>
    %cst_68 = arith.constant 5.000000e-01 : f32
    %237 = vector.broadcast %cst_68 : f32 to vector<8x32xf32>
    %238 = arith.mulf %237, %236 : vector<8x32xf32>
    %cst_69 = arith.constant 5.000000e-01 : f32
    %239 = vector.broadcast %cst_69 : f32 to vector<8x32xf32>
    %240 = arith.addf %238, %239 : vector<8x32xf32>
    %241 = arith.mulf %240, %193 : vector<8x32xf32>
    %242 = arith.mulf %229, %230 : vector<8x32xf32>
    %243 = arith.addf %241, %242 : vector<8x32xf32>
    %244 = math.tanh %243 : vector<8x32xf32>
    %245 = arith.mulf %235, %244 : vector<8x32xf32>
    %246 = arith.addf %11, %223 : vector<8x128xf32>
    %247 = math.tanh %246 : vector<8x128xf32>
    %248 = vector.extract_strided_slice %247 {offsets = [0, 0], sizes = [8, 32], strides = [1, 1]} : vector<8x128xf32> to vector<8x32xf32>
    %cst_70 = arith.constant 5.000000e-01 : f32
    %249 = vector.broadcast %cst_70 : f32 to vector<8x32xf32>
    %250 = arith.mulf %249, %248 : vector<8x32xf32>
    %cst_71 = arith.constant 5.000000e-01 : f32
    %251 = vector.broadcast %cst_71 : f32 to vector<8x32xf32>
    %252 = arith.addf %250, %251 : vector<8x32xf32>
    %253 = vector.extract_strided_slice %247 {offsets = [0, 64], sizes = [8, 32], strides = [1, 1]} : vector<8x128xf32> to vector<8x32xf32>
    %254 = vector.extract_strided_slice %247 {offsets = [0, 96], sizes = [8, 32], strides = [1, 1]} : vector<8x128xf32> to vector<8x32xf32>
    %cst_72 = arith.constant 5.000000e-01 : f32
    %255 = vector.broadcast %cst_72 : f32 to vector<8x32xf32>
    %256 = arith.mulf %255, %254 : vector<8x32xf32>
    %cst_73 = arith.constant 5.000000e-01 : f32
    %257 = vector.broadcast %cst_73 : f32 to vector<8x32xf32>
    %258 = arith.addf %256, %257 : vector<8x32xf32>
    %259 = vector.extract_strided_slice %247 {offsets = [0, 32], sizes = [8, 32], strides = [1, 1]} : vector<8x128xf32> to vector<8x32xf32>
    %cst_74 = arith.constant 5.000000e-01 : f32
    %260 = vector.broadcast %cst_74 : f32 to vector<8x32xf32>
    %261 = arith.mulf %260, %259 : vector<8x32xf32>
    %cst_75 = arith.constant 5.000000e-01 : f32
    %262 = vector.broadcast %cst_75 : f32 to vector<8x32xf32>
    %263 = arith.addf %261, %262 : vector<8x32xf32>
    %264 = arith.mulf %263, %216 : vector<8x32xf32>
    %265 = arith.mulf %252, %253 : vector<8x32xf32>
    %266 = arith.addf %264, %265 : vector<8x32xf32>
    %267 = math.tanh %266 : vector<8x32xf32>
    %268 = arith.mulf %258, %267 : vector<8x32xf32>
    %269 = tpu.concatenate %268, %245 in 1 : vector<8x32xf32>, vector<8x32xf32> -> vector<8x64xf32>
    %cst_76 = arith.constant dense<0.000000e+00> : vector<8x256xf32>
    %270 = tpu.matmul %269, %0, %cst_76 {dimension_numbers = #tpu.dot_dimension_numbers<[1], [0], [0], [1], [0, 0, 1, 1], [], []>} : vector<8x64xf32>, vector<64x256xf32>, vector<8x256xf32> -> vector<8x256xf32>
    %271 = vector.extract_strided_slice %270 {offsets = [0, 0], sizes = [8, 128], strides = [1, 1]} : vector<8x256xf32> to vector<8x128xf32>
    %272 = arith.addf %271, %5 : vector<8x128xf32>
    %273 = vector.extract_strided_slice %270 {offsets = [0, 128], sizes = [8, 128], strides = [1, 1]} : vector<8x256xf32> to vector<8x128xf32>
    %274 = math.tanh %272 : vector<8x128xf32>
    %275 = vector.extract_strided_slice %274 {offsets = [0, 0], sizes = [8, 32], strides = [1, 1]} : vector<8x128xf32> to vector<8x32xf32>
    %cst_77 = arith.constant 5.000000e-01 : f32
    %276 = vector.broadcast %cst_77 : f32 to vector<8x32xf32>
    %277 = arith.mulf %276, %275 : vector<8x32xf32>
    %cst_78 = arith.constant 5.000000e-01 : f32
    %278 = vector.broadcast %cst_78 : f32 to vector<8x32xf32>
    %279 = arith.addf %277, %278 : vector<8x32xf32>
    %280 = vector.extract_strided_slice %274 {offsets = [0, 64], sizes = [8, 32], strides = [1, 1]} : vector<8x128xf32> to vector<8x32xf32>
    %281 = vector.extract_strided_slice %274 {offsets = [0, 96], sizes = [8, 32], strides = [1, 1]} : vector<8x128xf32> to vector<8x32xf32>
    %cst_79 = arith.constant 5.000000e-01 : f32
    %282 = vector.broadcast %cst_79 : f32 to vector<8x32xf32>
    %283 = arith.mulf %282, %281 : vector<8x32xf32>
    %cst_80 = arith.constant 5.000000e-01 : f32
    %284 = vector.broadcast %cst_80 : f32 to vector<8x32xf32>
    %285 = arith.addf %283, %284 : vector<8x32xf32>
    %286 = vector.extract_strided_slice %274 {offsets = [0, 32], sizes = [8, 32], strides = [1, 1]} : vector<8x128xf32> to vector<8x32xf32>
    %cst_81 = arith.constant 5.000000e-01 : f32
    %287 = vector.broadcast %cst_81 : f32 to vector<8x32xf32>
    %288 = arith.mulf %287, %286 : vector<8x32xf32>
    %cst_82 = arith.constant 5.000000e-01 : f32
    %289 = vector.broadcast %cst_82 : f32 to vector<8x32xf32>
    %290 = arith.addf %288, %289 : vector<8x32xf32>
    %291 = arith.mulf %290, %243 : vector<8x32xf32>
    %292 = arith.mulf %279, %280 : vector<8x32xf32>
    %293 = arith.addf %291, %292 : vector<8x32xf32>
    %294 = math.tanh %293 : vector<8x32xf32>
    %295 = arith.mulf %285, %294 : vector<8x32xf32>
    %296 = arith.addf %11, %273 : vector<8x128xf32>
    %297 = math.tanh %296 : vector<8x128xf32>
    %298 = vector.extract_strided_slice %297 {offsets = [0, 0], sizes = [8, 32], strides = [1, 1]} : vector<8x128xf32> to vector<8x32xf32>
    %cst_83 = arith.constant 5.000000e-01 : f32
    %299 = vector.broadcast %cst_83 : f32 to vector<8x32xf32>
    %300 = arith.mulf %299, %298 : vector<8x32xf32>
    %cst_84 = arith.constant 5.000000e-01 : f32
    %301 = vector.broadcast %cst_84 : f32 to vector<8x32xf32>
    %302 = arith.addf %300, %301 : vector<8x32xf32>
    %303 = vector.extract_strided_slice %297 {offsets = [0, 64], sizes = [8, 32], strides = [1, 1]} : vector<8x128xf32> to vector<8x32xf32>
    %304 = vector.extract_strided_slice %297 {offsets = [0, 96], sizes = [8, 32], strides = [1, 1]} : vector<8x128xf32> to vector<8x32xf32>
    %cst_85 = arith.constant 5.000000e-01 : f32
    %305 = vector.broadcast %cst_85 : f32 to vector<8x32xf32>
    %306 = arith.mulf %305, %304 : vector<8x32xf32>
    %cst_86 = arith.constant 5.000000e-01 : f32
    %307 = vector.broadcast %cst_86 : f32 to vector<8x32xf32>
    %308 = arith.addf %306, %307 : vector<8x32xf32>
    %309 = vector.extract_strided_slice %297 {offsets = [0, 32], sizes = [8, 32], strides = [1, 1]} : vector<8x128xf32> to vector<8x32xf32>
    %cst_87 = arith.constant 5.000000e-01 : f32
    %310 = vector.broadcast %cst_87 : f32 to vector<8x32xf32>
    %311 = arith.mulf %310, %309 : vector<8x32xf32>
    %cst_88 = arith.constant 5.000000e-01 : f32
    %312 = vector.broadcast %cst_88 : f32 to vector<8x32xf32>
    %313 = arith.addf %311, %312 : vector<8x32xf32>
    %314 = arith.mulf %313, %266 : vector<8x32xf32>
    %315 = arith.mulf %302, %303 : vector<8x32xf32>
    %316 = arith.addf %314, %315 : vector<8x32xf32>
    %317 = math.tanh %316 : vector<8x32xf32>
    %318 = arith.mulf %308, %317 : vector<8x32xf32>
    %319 = tpu.concatenate %318, %295 in 1 : vector<8x32xf32>, vector<8x32xf32> -> vector<8x64xf32>
    %cst_89 = arith.constant dense<0.000000e+00> : vector<8x256xf32>
    %320 = tpu.matmul %319, %0, %cst_89 {dimension_numbers = #tpu.dot_dimension_numbers<[1], [0], [0], [1], [0, 0, 1, 1], [], []>} : vector<8x64xf32>, vector<64x256xf32>, vector<8x256xf32> -> vector<8x256xf32>
    %321 = vector.extract_strided_slice %320 {offsets = [0, 0], sizes = [8, 128], strides = [1, 1]} : vector<8x256xf32> to vector<8x128xf32>
    %322 = arith.addf %321, %5 : vector<8x128xf32>
    %323 = vector.extract_strided_slice %320 {offsets = [0, 128], sizes = [8, 128], strides = [1, 1]} : vector<8x256xf32> to vector<8x128xf32>
    %324 = math.tanh %322 : vector<8x128xf32>
    %325 = vector.extract_strided_slice %324 {offsets = [0, 0], sizes = [8, 32], strides = [1, 1]} : vector<8x128xf32> to vector<8x32xf32>
    %cst_90 = arith.constant 5.000000e-01 : f32
    %326 = vector.broadcast %cst_90 : f32 to vector<8x32xf32>
    %327 = arith.mulf %326, %325 : vector<8x32xf32>
    %cst_91 = arith.constant 5.000000e-01 : f32
    %328 = vector.broadcast %cst_91 : f32 to vector<8x32xf32>
    %329 = arith.addf %327, %328 : vector<8x32xf32>
    %330 = vector.extract_strided_slice %324 {offsets = [0, 64], sizes = [8, 32], strides = [1, 1]} : vector<8x128xf32> to vector<8x32xf32>
    %331 = vector.extract_strided_slice %324 {offsets = [0, 96], sizes = [8, 32], strides = [1, 1]} : vector<8x128xf32> to vector<8x32xf32>
    %cst_92 = arith.constant 5.000000e-01 : f32
    %332 = vector.broadcast %cst_92 : f32 to vector<8x32xf32>
    %333 = arith.mulf %332, %331 : vector<8x32xf32>
    %cst_93 = arith.constant 5.000000e-01 : f32
    %334 = vector.broadcast %cst_93 : f32 to vector<8x32xf32>
    %335 = arith.addf %333, %334 : vector<8x32xf32>
    %336 = vector.extract_strided_slice %324 {offsets = [0, 32], sizes = [8, 32], strides = [1, 1]} : vector<8x128xf32> to vector<8x32xf32>
    %cst_94 = arith.constant 5.000000e-01 : f32
    %337 = vector.broadcast %cst_94 : f32 to vector<8x32xf32>
    %338 = arith.mulf %337, %336 : vector<8x32xf32>
    %cst_95 = arith.constant 5.000000e-01 : f32
    %339 = vector.broadcast %cst_95 : f32 to vector<8x32xf32>
    %340 = arith.addf %338, %339 : vector<8x32xf32>
    %341 = arith.mulf %340, %293 : vector<8x32xf32>
    %342 = arith.mulf %329, %330 : vector<8x32xf32>
    %343 = arith.addf %341, %342 : vector<8x32xf32>
    %344 = math.tanh %343 : vector<8x32xf32>
    %345 = arith.mulf %335, %344 : vector<8x32xf32>
    %346 = arith.addf %11, %323 : vector<8x128xf32>
    %347 = math.tanh %346 : vector<8x128xf32>
    %348 = vector.extract_strided_slice %347 {offsets = [0, 0], sizes = [8, 32], strides = [1, 1]} : vector<8x128xf32> to vector<8x32xf32>
    %cst_96 = arith.constant 5.000000e-01 : f32
    %349 = vector.broadcast %cst_96 : f32 to vector<8x32xf32>
    %350 = arith.mulf %349, %348 : vector<8x32xf32>
    %cst_97 = arith.constant 5.000000e-01 : f32
    %351 = vector.broadcast %cst_97 : f32 to vector<8x32xf32>
    %352 = arith.addf %350, %351 : vector<8x32xf32>
    %353 = vector.extract_strided_slice %347 {offsets = [0, 64], sizes = [8, 32], strides = [1, 1]} : vector<8x128xf32> to vector<8x32xf32>
    %354 = vector.extract_strided_slice %347 {offsets = [0, 96], sizes = [8, 32], strides = [1, 1]} : vector<8x128xf32> to vector<8x32xf32>
    %cst_98 = arith.constant 5.000000e-01 : f32
    %355 = vector.broadcast %cst_98 : f32 to vector<8x32xf32>
    %356 = arith.mulf %355, %354 : vector<8x32xf32>
    %cst_99 = arith.constant 5.000000e-01 : f32
    %357 = vector.broadcast %cst_99 : f32 to vector<8x32xf32>
    %358 = arith.addf %356, %357 : vector<8x32xf32>
    %359 = vector.extract_strided_slice %347 {offsets = [0, 32], sizes = [8, 32], strides = [1, 1]} : vector<8x128xf32> to vector<8x32xf32>
    %cst_100 = arith.constant 5.000000e-01 : f32
    %360 = vector.broadcast %cst_100 : f32 to vector<8x32xf32>
    %361 = arith.mulf %360, %359 : vector<8x32xf32>
    %cst_101 = arith.constant 5.000000e-01 : f32
    %362 = vector.broadcast %cst_101 : f32 to vector<8x32xf32>
    %363 = arith.addf %361, %362 : vector<8x32xf32>
    %364 = arith.mulf %363, %316 : vector<8x32xf32>
    %365 = arith.mulf %352, %353 : vector<8x32xf32>
    %366 = arith.addf %364, %365 : vector<8x32xf32>
    %367 = math.tanh %366 : vector<8x32xf32>
    %368 = arith.mulf %358, %367 : vector<8x32xf32>
    %369 = tpu.concatenate %368, %345 in 1 : vector<8x32xf32>, vector<8x32xf32> -> vector<8x64xf32>
    %cst_102 = arith.constant dense<0.000000e+00> : vector<8x128xf32>
    %370 = tpu.matmul %369, %2, %cst_102 {dimension_numbers = #tpu.dot_dimension_numbers<[1], [0], [0], [1], [0, 0, 1, 1], [], []>} : vector<8x64xf32>, vector<64x128xf32>, vector<8x128xf32> -> vector<8x128xf32>
    %371 = arith.addf %370, %5 : vector<8x128xf32>
    %372 = math.tanh %371 : vector<8x128xf32>
    %373 = vector.extract_strided_slice %372 {offsets = [0, 0], sizes = [8, 32], strides = [1, 1]} : vector<8x128xf32> to vector<8x32xf32>
    %cst_103 = arith.constant 5.000000e-01 : f32
    %374 = vector.broadcast %cst_103 : f32 to vector<8x32xf32>
    %375 = arith.mulf %374, %373 : vector<8x32xf32>
    %cst_104 = arith.constant 5.000000e-01 : f32
    %376 = vector.broadcast %cst_104 : f32 to vector<8x32xf32>
    %377 = arith.addf %375, %376 : vector<8x32xf32>
    %378 = vector.extract_strided_slice %372 {offsets = [0, 64], sizes = [8, 32], strides = [1, 1]} : vector<8x128xf32> to vector<8x32xf32>
    %379 = vector.extract_strided_slice %372 {offsets = [0, 96], sizes = [8, 32], strides = [1, 1]} : vector<8x128xf32> to vector<8x32xf32>
    %cst_105 = arith.constant 5.000000e-01 : f32
    %380 = vector.broadcast %cst_105 : f32 to vector<8x32xf32>
    %381 = arith.mulf %380, %379 : vector<8x32xf32>
    %cst_106 = arith.constant 5.000000e-01 : f32
    %382 = vector.broadcast %cst_106 : f32 to vector<8x32xf32>
    %383 = arith.addf %381, %382 : vector<8x32xf32>
    %384 = vector.extract_strided_slice %372 {offsets = [0, 32], sizes = [8, 32], strides = [1, 1]} : vector<8x128xf32> to vector<8x32xf32>
    %cst_107 = arith.constant 5.000000e-01 : f32
    %385 = vector.broadcast %cst_107 : f32 to vector<8x32xf32>
    %386 = arith.mulf %385, %384 : vector<8x32xf32>
    %cst_108 = arith.constant 5.000000e-01 : f32
    %387 = vector.broadcast %cst_108 : f32 to vector<8x32xf32>
    %388 = arith.addf %386, %387 : vector<8x32xf32>
    %389 = arith.mulf %388, %343 : vector<8x32xf32>
    %390 = arith.mulf %377, %378 : vector<8x32xf32>
    %391 = arith.addf %389, %390 : vector<8x32xf32>
    %392 = math.tanh %391 : vector<8x32xf32>
    %393 = arith.mulf %383, %392 : vector<8x32xf32>
    %394 = tpu.concatenate %45, %95, %145, %195, %245, %295, %345, %393 in 1 : vector<8x32xf32>, vector<8x32xf32>, vector<8x32xf32>, vector<8x32xf32>, vector<8x32xf32>, vector<8x32xf32>, vector<8x32xf32>, vector<8x32xf32> -> vector<8x256xf32>
    %c0_109 = arith.constant 0 : index
    %c0_110 = arith.constant 0 : index
    %395 = vector.load %arg5[%c0_109, %c0_110] : memref<8x256xf32, #tpu.memory_space<vmem>>, vector<8x256xf32>
    tpu.vector_store %arg5[%c0_109, %c0_110], %394 {strides = array<i32>} : memref<8x256xf32, #tpu.memory_space<vmem>>, vector<8x256xf32>,
    return
  }
}

</mosaic_0001>

<llo_original>
// kernel: tpu_custom_call.1
$region0: #{tpu_custom_call.1}
  #allocation0 [shape = 'u32[]', space=smem, size = 0x4, offset = 0x4, fixed_abs, tag = 'smem constant byte address 0x4 - core index']
  #allocation1 [shape = 'u32[144,128]{1,0:T(1,128)}', space=vmem, size = 0x12000, scoped, tag = 'internal scratch']
  %s0 = inlined_call_operand.hbm [shape: f32[8,32], index: 0, kind: input, shape index: {}]
  %s1 = inlined_call_operand.hbm [shape: f32[32,128], index: 1, kind: input, shape index: {}]
  %s2 = inlined_call_operand.vmem [shape: f32[1,128], index: 2, kind: input, shape index: {}]
  %s3 = inlined_call_operand.hbm [shape: f32[64,256], index: 3, kind: input, shape index: {}]
  %s4 = inlined_call_operand.vmem [shape: f32[1,128], index: 4, kind: input, shape index: {}]
  %s5 = inlined_call_operand.hbm [shape: f32[8,256], index: 5, kind: output, shape index: {}]
  %s6 = sld [smem:[#allocation0]]
  $region42: #{tpu_custom_call.1} parent=0
    _
  %s8 = ssub.s32 1, %s6
  %s9 = scalar_select 0, %s8, %s6
  $region1: #{tpu_custom_call.1} parent=0
    #allocation2 [shape = 'u8[4096]{0}', space=vmem, size = 0x1000, scoped, tag = 'input window, operand 0, single buffered']
    #allocation3 [shape = 's32[1]{0}', space=sflag, size = 0x4, scoped, tag = 'scoped memory for tpu_custom_call.1']
    #allocation4 [shape = 's32[1]{0}', space=sflag, size = 0x4, scoped, tag = 'scoped memory for tpu_custom_call.1']
    #allocation5 [shape = 'u8[16384]{0}', space=vmem, size = 0x4000, scoped, tag = 'input window, operand 1, single buffered']
    #allocation6 [shape = 's32[1]{0}', space=sflag, size = 0x4, scoped, tag = 'scoped memory for tpu_custom_call.1']
    #allocation7 [shape = 'u8[65536]{0}', space=vmem, size = 0x10000, scoped, tag = 'input window, operand 3, single buffered']
    #allocation8 [shape = 'u8[8192]{0}', space=vmem, size = 0x2000, scoped, tag = 'output window, operand 0, single buffered']
    %10 = vsyncpa [#allocation3], 0
    %11 = vsyncpa [#allocation6], 0
    %12 = vsyncpa [#allocation4], 0
    // Predicated region
    $region2: #{tpu_custom_call.1} parent=1 // pred_check
      _
    $region3: #{tpu_custom_call.1} parent=1 // pred_check_branch
      %14 = sbr.rel (0) target = $region5
    $region4: #{tpu_custom_call.1} parent=1 // pred_region
      %s16 = ssub.s32 128, 128
      %17 = vsyncadd [#allocation3], %s16
      %s19 = sshll.u32 [#allocation2], 4
      %s20 = int_to_ptr.vmem [resolvable:$true] %s19
      %22 = dma.hbm_to_vmem [thread:$0]  %s0, 128, %s20, [#allocation3]
    $region5: #{tpu_custom_call.1} parent=1 // pred_fallthru
      _
    // Predicated region
    $region6: #{tpu_custom_call.1} parent=1 // pred_check
      _
    $region7: #{tpu_custom_call.1} parent=1 // pred_check_branch
      %24 = sbr.rel (0) target = $region9
    $region8: #{tpu_custom_call.1} parent=1 // pred_region
      %s26 = ssub.s32 512, 512
      %27 = vsyncadd [#allocation6], %s26
      %s28 = sshll.u32 [#allocation5], 4
      %s29 = int_to_ptr.vmem [resolvable:$true] %s28
      %34 = dma.hbm_to_vmem [thread:$0]  %s1, 512, %s29, [#allocation6], 128, 128, 8
    $region9: #{tpu_custom_call.1} parent=1 // pred_fallthru
      _
    // Predicated region
    $region10: #{tpu_custom_call.1} parent=1 // pred_check
      _
    $region11: #{tpu_custom_call.1} parent=1 // pred_check_branch
      %36 = sbr.rel (0) target = $region13
    $region12: #{tpu_custom_call.1} parent=1 // pred_region
      _
    $region13: #{tpu_custom_call.1} parent=1 // pred_fallthru
      _
    // Predicated region
    $region14: #{tpu_custom_call.1} parent=1 // pred_check
      _
    $region15: #{tpu_custom_call.1} parent=1 // pred_check_branch
      %38 = sbr.rel (0) target = $region17
    $region16: #{tpu_custom_call.1} parent=1 // pred_region
      %s40 = ssub.s32 2048, 2048
      %41 = vsyncadd [#allocation6], %s40
      %s42 = sshll.u32 [#allocation7], 4
      %s43 = int_to_ptr.vmem [resolvable:$true] %s42
      %48 = dma.hbm_to_vmem [thread:$0]  %s3, 2048, %s43, [#allocation6], 256, 256, 16
    $region17: #{tpu_custom_call.1} parent=1 // pred_fallthru
      _
    // Predicated region
    $region18: #{tpu_custom_call.1} parent=1 // pred_check
      _
    $region19: #{tpu_custom_call.1} parent=1 // pred_check_branch
      %50 = sbr.rel (0) target = $region21
    $region20: #{tpu_custom_call.1} parent=1 // pred_region
      _
    $region21: #{tpu_custom_call.1} parent=1 // pred_fallthru
      _
    // Predicated region
    $region22: #{tpu_custom_call.1} parent=1 // pred_check
      _
    $region23: #{tpu_custom_call.1} parent=1 // pred_check_branch
      %52 = sbr.rel (0) target = $region25
    $region24: #{tpu_custom_call.1} parent=1 // pred_region
      %53 = dma.done [#allocation3], 128
    $region25: #{tpu_custom_call.1} parent=1 // pred_fallthru
      _
    // Predicated region
    $region26: #{tpu_custom_call.1} parent=1 // pred_check
      _
    $region27: #{tpu_custom_call.1} parent=1 // pred_check_branch
      %55 = sbr.rel (0) target = $region29
    $region28: #{tpu_custom_call.1} parent=1 // pred_region
      %56 = dma.done [#allocation6], 512
    $region29: #{tpu_custom_call.1} parent=1 // pred_fallthru
      _
    // Predicated region
    $region30: #{tpu_custom_call.1} parent=1 // pred_check
      _
    $region31: #{tpu_custom_call.1} parent=1 // pred_check_branch
      %58 = sbr.rel (0) target = $region33
    $region32: #{tpu_custom_call.1} parent=1 // pred_region
      %59 = dma.done [#allocation6], 2048
    $region33: #{tpu_custom_call.1} parent=1 // pred_fallthru
      _
    %v60 = vld [vmem:[#allocation7] sm:$0xff]
    %v61 = vld [vmem:[#allocation7 + $0x8] sm:$0xff]
    %v62 = vld [vmem:[#allocation7 + $0x10] sm:$0xff]
    %v63 = vld [vmem:[#allocation7 + $0x18] sm:$0xff]
    %v64 = vld [vmem:[#allocation7 + $0x20] sm:$0xff]
    %v65 = vld [vmem:[#allocation7 + $0x28] sm:$0xff]
    %v66 = vld [vmem:[#allocation7 + $0x30] sm:$0xff]
    %v67 = vld [vmem:[#allocation7 + $0x38] sm:$0xff]
    %v68 = vld [vmem:[#allocation7 + $0x40] sm:$0xff]
    %v69 = vld [vmem:[#allocation7 + $0x48] sm:$0xff]
    %v70 = vld [vmem:[#allocation7 + $0x50] sm:$0xff]
    %v71 = vld [vmem:[#allocation7 + $0x58] sm:$0xff]
    %v72 = vld [vmem:[#allocation7 + $0x60] sm:$0xff]
    %v73 = vld [vmem:[#allocation7 + $0x68] sm:$0xff]
    %v74 = vld [vmem:[#allocation7 + $0x70] sm:$0xff]
    %v75 = vld [vmem:[#allocation7 + $0x78] sm:$0xff]
    %v76 = vld [vmem:[%s4] sm:$0x1]
    %v78 = vlaneseq
    %v79 = vshrl.u32 %v78, 7
    %v80 = vsub.s32 0, %v79
    %v81 = vrot.slane %v76, %v80
    %v83 = vld [vmem:[#allocation2] sm:$0xff]
    %v84 = vld [vmem:[#allocation5] sm:$0xff]
    %v85 = vld [vmem:[#allocation5 + $0x8] sm:$0xff]
    %v86 = vld [vmem:[#allocation5 + $0x10] sm:$0xff]
    %v87 = vld [vmem:[#allocation5 + $0x18] sm:$0xff]
    %v88 = vld [vmem:[%s2] sm:$0x1]
    %v90 = vlaneseq
    %v91 = vshrl.u32 %v90, 7
    %v92 = vsub.s32 0, %v91
    %v93 = vrot.slane %v88, %v92
    %vm95 = vcmask 261120
    %v97 = vsel %vm95, %v83, 0
    %99 = vmatprep.subr.mxu0 0.0
    %100 = vmatpush1.msra.mxu0 0.0
    %101 = vmatprep.subr.mxu0 0.0
    %102 = vmatpush1.msra.mxu0 0.0
    %103 = vmatprep.subr.mxu0 0.0
    %104 = vmatpush1.msra.mxu0 0.0
    %105 = vmatprep.subr.mxu0 0.0
    %106 = vmatpush1.msra.mxu0 0.0
    %107 = vmatprep.subr.mxu0 0.0
    %108 = vmatpush1.msra.mxu0 0.0
    %109 = vmatprep.subr.mxu0 0.0
    %110 = vmatpush1.msra.mxu0 0.0
    %111 = vmatprep.subr.mxu0 0.0
    %112 = vmatpush1.msra.mxu0 0.0
    %113 = vmatprep.subr.mxu0 0.0
    %114 = vmatpush1.msra.mxu0 0.0
    %115 = vmatprep.subr.mxu0 0.0
    %116 = vmatpush1.msra.mxu0 0.0
    %117 = vmatprep.subr.mxu0 0.0
    %118 = vmatpush1.msra.mxu0 0.0
    %119 = vmatprep.subr.mxu0 0.0
    %120 = vmatpush1.msra.mxu0 0.0
    %121 = vmatprep.subr.mxu0 0.0
    %122 = vmatpush1.msra.mxu0 0.0
    %123 = vmatprep.subr.mxu0 0.0
    %124 = vmatpush1.msra.mxu0 %v87
    %125 = vmatprep.subr.mxu0 0.0
    %126 = vmatpush1.msra.mxu0 %v86
    %127 = vmatprep.subr.mxu0 0.0
    %128 = vmatpush1.msra.mxu0 %v85
    %129 = vmatprep.subr.mxu0 0.0
    %130 = vmatpush1.msra.mxu0 %v84
    %131 = vmatprep.subr.mxu0 0.0
    %132 = vmatpush2.msra.mxu0 0.0
    %133 = vmatprep.subr.mxu0 0.0
    %134 = vmatpush2.msra.mxu0 0.0
    %135 = vmatprep.subr.mxu0 0.0
    %136 = vmatpush2.msra.mxu0 0.0
    %137 = vmatprep.subr.mxu0 0.0
    %138 = vmatpush2.msra.mxu0 0.0
    %139 = vmatprep.subr.mxu0 0.0
    %140 = vmatpush2.msra.mxu0 0.0
    %141 = vmatprep.subr.mxu0 0.0
    %142 = vmatpush2.msra.mxu0 0.0
    %143 = vmatprep.subr.mxu0 0.0
    %144 = vmatpush2.msra.mxu0 0.0
    %145 = vmatprep.subr.mxu0 0.0
    %146 = vmatpush2.msra.mxu0 0.0
    %147 = vmatprep.subr.mxu0 0.0
    %148 = vmatpush2.msra.mxu0 0.0
    %149 = vmatprep.subr.mxu0 0.0
    %150 = vmatpush2.msra.mxu0 0.0
    %151 = vmatprep.subr.mxu0 0.0
    %152 = vmatpush2.msra.mxu0 0.0
    %153 = vmatprep.subr.mxu0 0.0
    %154 = vmatpush2.msra.mxu0 0.0
    %155 = vmatprep.subr.mxu0 0.0
    %156 = vmatpush2.msra.mxu0 0.0
    %157 = vmatprep.subr.mxu0 0.0
    %158 = vmatpush2.msra.mxu0 0.0
    %159 = vmatprep.subr.mxu0 0.0
    %160 = vmatpush2.msra.mxu0 0.0
    %161 = vmatprep.subr.mxu0 0.0
    %162 = vmatpush2.msra.mxu0 0.0
    %163 = vmatprep.mubr.f32.mxu0 0.0
    %164 = vmatmul.mubr.f32.gmra.mxu0 %v97
    %v165 = vpop.f32.mrf.mxu0
    %v166 = vadd.f32 %v93, %v165
    %v167 = vpop.f32.mrf.mxu0
    %168 = vdwg.mxu0
    %v169 = vtanh.pop %v166
    %v170 = vmul.f32 %v169, 0.5
    %v171 = vadd.f32 %v170, 0.5
    %173 = vrot.lane.b32.xlu0 %v169, 64
    %v174 = vpop.permute.xlu0 %173
    %v176 = vmul.f32 %v171, %v174
    %v177 = vtanh.pop %v176
    %179 = vrot.lane.b32.xlu0 %v177, 96
    %v180 = vpop.permute.xlu0 %179
    %v182 = vmul.f32 %v171, %v180
    %184 = vrot.lane.b32.xlu0 %v182, 32
    %v185 = vpop.permute.xlu0 %184
    %v186 = vsel %vm95, %v185, 0
    %188 = vmatprep.subr.mxu0 0.0
    %189 = vmatpush1.msra.mxu0 0.0
    %190 = vmatprep.subr.mxu0 0.0
    %191 = vmatpush1.msra.mxu0 0.0
    %192 = vmatprep.subr.mxu0 0.0
    %193 = vmatpush1.msra.mxu0 0.0
    %194 = vmatprep.subr.mxu0 0.0
    %195 = vmatpush1.msra.mxu0 0.0
    %196 = vmatprep.subr.mxu0 0.0
    %197 = vmatpush1.msra.mxu0 0.0
    %198 = vmatprep.subr.mxu0 0.0
    %199 = vmatpush1.msra.mxu0 0.0
    %200 = vmatprep.subr.mxu0 0.0
    %201 = vmatpush1.msra.mxu0 0.0
    %202 = vmatprep.subr.mxu0 0.0
    %203 = vmatpush1.msra.mxu0 0.0
    %204 = vmatprep.subr.mxu0 0.0
    %205 = vmatpush1.msra.mxu0 0.0
    %206 = vmatprep.subr.mxu0 0.0
    %207 = vmatpush1.msra.mxu0 0.0
    %208 = vmatprep.subr.mxu0 0.0
    %209 = vmatpush1.msra.mxu0 0.0
    %210 = vmatprep.subr.mxu0 0.0
    %211 = vmatpush1.msra.mxu0 0.0
    %212 = vmatprep.subr.mxu0 %v67
    %213 = vmatpush1.msra.mxu0 %v66
    %214 = vmatprep.subr.mxu0 %v65
    %215 = vmatpush1.msra.mxu0 %v64
    %216 = vmatprep.subr.mxu0 %v63
    %217 = vmatpush1.msra.mxu0 %v62
    %218 = vmatprep.subr.mxu0 %v61
    %219 = vmatpush1.msra.mxu0 %v60
    %220 = vmatprep.subr.mxu0 0.0
    %221 = vmatpush2.msra.mxu0 0.0
    %222 = vmatprep.subr.mxu0 0.0
    %223 = vmatpush2.msra.mxu0 0.0
    %224 = vmatprep.subr.mxu0 0.0
    %225 = vmatpush2.msra.mxu0 0.0
    %226 = vmatprep.subr.mxu0 0.0
    %227 = vmatpush2.msra.mxu0 0.0
    %228 = vmatprep.subr.mxu0 0.0
    %229 = vmatpush2.msra.mxu0 0.0
    %230 = vmatprep.subr.mxu0 0.0
    %231 = vmatpush2.msra.mxu0 0.0
    %232 = vmatprep.subr.mxu0 0.0
    %233 = vmatpush2.msra.mxu0 0.0
    %234 = vmatprep.subr.mxu0 0.0
    %235 = vmatpush2.msra.mxu0 0.0
    %236 = vmatprep.subr.mxu0 0.0
    %237 = vmatpush2.msra.mxu0 0.0
    %238 = vmatprep.subr.mxu0 0.0
    %239 = vmatpush2.msra.mxu0 0.0
    %240 = vmatprep.subr.mxu0 0.0
    %241 = vmatpush2.msra.mxu0 0.0
    %242 = vmatprep.subr.mxu0 0.0
    %243 = vmatpush2.msra.mxu0 0.0
    %244 = vmatprep.subr.mxu0 0.0
    %245 = vmatpush2.msra.mxu0 0.0
    %246 = vmatprep.subr.mxu0 0.0
    %247 = vmatpush2.msra.mxu0 0.0
    %248 = vmatprep.subr.mxu0 0.0
    %249 = vmatpush2.msra.mxu0 0.0
    %250 = vmatprep.subr.mxu0 0.0
    %251 = vmatpush2.msra.mxu0 0.0
    %252 = vmatprep.mubr.f32.mxu0 0.0
    %253 = vmatmul.mubr.f32.gmra.mxu0 %v186
    %v254 = vpop.f32.mrf.mxu0
    %v255 = vadd.f32 0.0, %v254
    %v256 = vpop.f32.mrf.mxu0
    %v257 = vadd.f32 0.0, %v256
    %258 = vdwg.mxu0
    %v259 = vadd.f32 %v255, %v81
    %v260 = vtanh.pop %v259
    %v261 = vmul.f32 %v260, 0.5
    %v262 = vadd.f32 %v261, 0.5
    %264 = vrot.lane.b32.xlu0 %v260, 64
    %v265 = vpop.permute.xlu0 %264
    %v267 = vmul.f32 %v262, %v265
    %v268 = vtanh.pop %v267
    %270 = vrot.lane.b32.xlu0 %v268, 96
    %v271 = vpop.permute.xlu0 %270
    %v273 = vmul.f32 %v262, %v271
    %v274 = vadd.f32 %v166, %v257
    %v275 = vtanh.pop %v274
    %v276 = vmul.f32 %v275, 0.5
    %v277 = vadd.f32 %v276, 0.5
    %279 = vrot.lane.b32.xlu0 %v176, 32
    %v280 = vpop.permute.xlu0 %279
    %v282 = vmul.f32 %v277, %v280
    %284 = vrot.lane.b32.xlu0 %v275, 64
    %v285 = vpop.permute.xlu0 %284
    %v287 = vmul.f32 %v277, %v285
    %289 = vrot.lane.b32.xlu0 %v287, 32
    %v290 = vpop.permute.xlu0 %289
    %v292 = vadd.f32 %v282, %v290
    %v293 = vtanh.pop %v292
    %295 = vrot.lane.b32.xlu0 %v293, 64
    %v296 = vpop.permute.xlu0 %295
    %v298 = vmul.f32 %v277, %v296
    %300 = vrot.lane.b32.xlu0 %v298, 32
    %v301 = vpop.permute.xlu0 %300
    %304 = vrot.lane.b32.xlu0 %v273, 64
    %v305 = vpop.permute.xlu0 %304
    %v307 = vsel %vm95, %v301, %v305
    %vm308 = vcmask 523264
    %v310 = vsel %vm308, %v307, 0
    %312 = vmatprep.subr.mxu0 0.0
    %313 = vmatpush1.msra.mxu0 0.0
    %314 = vmatprep.subr.mxu0 0.0
    %315 = vmatpush1.msra.mxu0 0.0
    %316 = vmatprep.subr.mxu0 0.0
    %317 = vmatpush1.msra.mxu0 0.0
    %318 = vmatprep.subr.mxu0 0.0
    %319 = vmatpush1.msra.mxu0 0.0
    %320 = vmatprep.subr.mxu0 0.0
    %321 = vmatpush1.msra.mxu0 0.0
    %322 = vmatprep.subr.mxu0 0.0
    %323 = vmatpush1.msra.mxu0 0.0
    %324 = vmatprep.subr.mxu0 0.0
    %325 = vmatpush1.msra.mxu0 0.0
    %326 = vmatprep.subr.mxu0 0.0
    %327 = vmatpush1.msra.mxu0 0.0
    %328 = vmatprep.subr.mxu0 %v75
    %329 = vmatpush1.msra.mxu0 %v74
    %330 = vmatprep.subr.mxu0 %v73
    %331 = vmatpush1.msra.mxu0 %v72
    %332 = vmatprep.subr.mxu0 %v71
    %333 = vmatpush1.msra.mxu0 %v70
    %334 = vmatprep.subr.mxu0 %v69
    %335 = vmatpush1.msra.mxu0 %v68
    %336 = vmatprep.subr.mxu0 %v67
    %337 = vmatpush1.msra.mxu0 %v66
    %338 = vmatprep.subr.mxu0 %v65
    %339 = vmatpush1.msra.mxu0 %v64
    %340 = vmatprep.subr.mxu0 %v63
    %341 = vmatpush1.msra.mxu0 %v62
    %342 = vmatprep.subr.mxu0 %v61
    %343 = vmatpush1.msra.mxu0 %v60
    %344 = vmatprep.subr.mxu0 0.0
    %345 = vmatpush2.msra.mxu0 0.0
    %346 = vmatprep.subr.mxu0 0.0
    %347 = vmatpush2.msra.mxu0 0.0
    %348 = vmatprep.subr.mxu0 0.0
    %349 = vmatpush2.msra.mxu0 0.0
    %350 = vmatprep.subr.mxu0 0.0
    %351 = vmatpush2.msra.mxu0 0.0
    %352 = vmatprep.subr.mxu0 0.0
    %353 = vmatpush2.msra.mxu0 0.0
    %354 = vmatprep.subr.mxu0 0.0
    %355 = vmatpush2.msra.mxu0 0.0
    %356 = vmatprep.subr.mxu0 0.0
    %357 = vmatpush2.msra.mxu0 0.0
    %358 = vmatprep.subr.mxu0 0.0
    %359 = vmatpush2.msra.mxu0 0.0
    %360 = vmatprep.subr.mxu0 0.0
    %361 = vmatpush2.msra.mxu0 0.0
    %362 = vmatprep.subr.mxu0 0.0
    %363 = vmatpush2.msra.mxu0 0.0
    %364 = vmatprep.subr.mxu0 0.0
    %365 = vmatpush2.msra.mxu0 0.0
    %366 = vmatprep.subr.mxu0 0.0
    %367 = vmatpush2.msra.mxu0 0.0
    %368 = vmatprep.subr.mxu0 0.0
    %369 = vmatpush2.msra.mxu0 0.0
    %370 = vmatprep.subr.mxu0 0.0
    %371 = vmatpush2.msra.mxu0 0.0
    %372 = vmatprep.subr.mxu0 0.0
    %373 = vmatpush2.msra.mxu0 0.0
    %374 = vmatprep.subr.mxu0 0.0
    %375 = vmatpush2.msra.mxu0 0.0
    %376 = vmatprep.mubr.f32.mxu0 0.0
    %377 = vmatmul.mubr.f32.gmra.mxu0 %v310
    %v378 = vpop.f32.mrf.mxu0
    %v379 = vadd.f32 0.0, %v378
    %v380 = vpop.f32.mrf.mxu0
    %v381 = vadd.f32 0.0, %v380
    %382 = vdwg.mxu0
    %v383 = vadd.f32 %v379, %v81
    %v384 = vtanh.pop %v383
    %v385 = vmul.f32 %v384, 0.5
    %v386 = vadd.f32 %v385, 0.5
    %388 = vrot.lane.b32.xlu0 %v267, 32
    %v389 = vpop.permute.xlu0 %388
    %v391 = vmul.f32 %v386, %v389
    %393 = vrot.lane.b32.xlu0 %v384, 64
    %v394 = vpop.permute.xlu0 %393
    %v396 = vmul.f32 %v386, %v394
    %398 = vrot.lane.b32.xlu0 %v396, 32
    %v399 = vpop.permute.xlu0 %398
    %v401 = vadd.f32 %v391, %v399
    %v402 = vtanh.pop %v401
    %404 = vrot.lane.b32.xlu0 %v402, 64
    %v405 = vpop.permute.xlu0 %404
    %v407 = vmul.f32 %v386, %v405
    %v408 = vadd.f32 %v166, %v381
    %v409 = vtanh.pop %v408
    %v410 = vmul.f32 %v409, 0.5
    %v411 = vadd.f32 %v410, 0.5
    %v412 = vmul.f32 %v411, %v292
    %414 = vrot.lane.b32.xlu0 %v409, 64
    %v415 = vpop.permute.xlu0 %414
    %v417 = vmul.f32 %v411, %v415
    %419 = vrot.lane.b32.xlu0 %v417, 32
    %v420 = vpop.permute.xlu0 %419
    %v422 = vadd.f32 %v412, %v420
    %v423 = vtanh.pop %v422
    %425 = vrot.lane.b32.xlu0 %v423, 64
    %v426 = vpop.permute.xlu0 %425
    %v428 = vmul.f32 %v411, %v426
    %430 = vrot.lane.b32.xlu0 %v428, 32
    %v431 = vpop.permute.xlu0 %430
    %434 = vrot.lane.b32.xlu0 %v407, 64
    %v435 = vpop.permute.xlu0 %434
    %v437 = vsel %vm95, %v431, %v435
    %v439 = vsel %vm308, %v437, 0
    %441 = vmatprep.subr.mxu0 0.0
    %442 = vmatpush1.msra.mxu0 0.0
    %443 = vmatprep.subr.mxu0 0.0
    %444 = vmatpush1.msra.mxu0 0.0
    %445 = vmatprep.subr.mxu0 0.0
    %446 = vmatpush1.msra.mxu0 0.0
    %447 = vmatprep.subr.mxu0 0.0
    %448 = vmatpush1.msra.mxu0 0.0
    %449 = vmatprep.subr.mxu0 0.0
    %450 = vmatpush1.msra.mxu0 0.0
    %451 = vmatprep.subr.mxu0 0.0
    %452 = vmatpush1.msra.mxu0 0.0
    %453 = vmatprep.subr.mxu0 0.0
    %454 = vmatpush1.msra.mxu0 0.0
    %455 = vmatprep.subr.mxu0 0.0
    %456 = vmatpush1.msra.mxu0 0.0
    %457 = vmatprep.subr.mxu0 %v75
    %458 = vmatpush1.msra.mxu0 %v74
    %459 = vmatprep.subr.mxu0 %v73
    %460 = vmatpush1.msra.mxu0 %v72
    %461 = vmatprep.subr.mxu0 %v71
    %462 = vmatpush1.msra.mxu0 %v70
    %463 = vmatprep.subr.mxu0 %v69
    %464 = vmatpush1.msra.mxu0 %v68
    %465 = vmatprep.subr.mxu0 %v67
    %466 = vmatpush1.msra.mxu0 %v66
    %467 = vmatprep.subr.mxu0 %v65
    %468 = vmatpush1.msra.mxu0 %v64
    %469 = vmatprep.subr.mxu0 %v63
    %470 = vmatpush1.msra.mxu0 %v62
    %471 = vmatprep.subr.mxu0 %v61
    %472 = vmatpush1.msra.mxu0 %v60
    %473 = vmatprep.subr.mxu0 0.0
    %474 = vmatpush2.msra.mxu0 0.0
    %475 = vmatprep.subr.mxu0 0.0
    %476 = vmatpush2.msra.mxu0 0.0
    %477 = vmatprep.subr.mxu0 0.0
    %478 = vmatpush2.msra.mxu0 0.0
    %479 = vmatprep.subr.mxu0 0.0
    %480 = vmatpush2.msra.mxu0 0.0
    %481 = vmatprep.subr.mxu0 0.0
    %482 = vmatpush2.msra.mxu0 0.0
    %483 = vmatprep.subr.mxu0 0.0
    %484 = vmatpush2.msra.mxu0 0.0
    %485 = vmatprep.subr.mxu0 0.0
    %486 = vmatpush2.msra.mxu0 0.0
    %487 = vmatprep.subr.mxu0 0.0
    %488 = vmatpush2.msra.mxu0 0.0
    %489 = vmatprep.subr.mxu0 0.0
    %490 = vmatpush2.msra.mxu0 0.0
    %491 = vmatprep.subr.mxu0 0.0
    %492 = vmatpush2.msra.mxu0 0.0
    %493 = vmatprep.subr.mxu0 0.0
    %494 = vmatpush2.msra.mxu0 0.0
    %495 = vmatprep.subr.mxu0 0.0
    %496 = vmatpush2.msra.mxu0 0.0
    %497 = vmatprep.subr.mxu0 0.0
    %498 = vmatpush2.msra.mxu0 0.0
    %499 = vmatprep.subr.mxu0 0.0
    %500 = vmatpush2.msra.mxu0 0.0
    %501 = vmatprep.subr.mxu0 0.0
    %502 = vmatpush2.msra.mxu0 0.0
    %503 = vmatprep.subr.mxu0 0.0
    %504 = vmatpush2.msra.mxu0 0.0
    %505 = vmatprep.mubr.f32.mxu0 0.0
    %506 = vmatmul.mubr.f32.gmra.mxu0 %v439
    %v507 = vpop.f32.mrf.mxu0
    %v508 = vadd.f32 0.0, %v507
    %v509 = vpop.f32.mrf.mxu0
    %v510 = vadd.f32 0.0, %v509
    %511 = vdwg.mxu0
    %v512 = vadd.f32 %v508, %v81
    %v513 = vtanh.pop %v512
    %v514 = vmul.f32 %v513, 0.5
    %v515 = vadd.f32 %v514, 0.5
    %v516 = vmul.f32 %v515, %v401
    %518 = vrot.lane.b32.xlu0 %v513, 64
    %v519 = vpop.permute.xlu0 %518
    %v521 = vmul.f32 %v515, %v519
    %523 = vrot.lane.b32.xlu0 %v521, 32
    %v524 = vpop.permute.xlu0 %523
    %v526 = vadd.f32 %v516, %v524
    %v527 = vtanh.pop %v526
    %529 = vrot.lane.b32.xlu0 %v527, 64
    %v530 = vpop.permute.xlu0 %529
    %v532 = vmul.f32 %v515, %v530
    %v533 = vadd.f32 %v166, %v510
    %v534 = vtanh.pop %v533
    %v535 = vmul.f32 %v534, 0.5
    %v536 = vadd.f32 %v535, 0.5
    %v537 = vmul.f32 %v536, %v422
    %539 = vrot.lane.b32.xlu0 %v534, 64
    %v540 = vpop.permute.xlu0 %539
    %v542 = vmul.f32 %v536, %v540
    %544 = vrot.lane.b32.xlu0 %v542, 32
    %v545 = vpop.permute.xlu0 %544
    %v547 = vadd.f32 %v537, %v545
    %v548 = vtanh.pop %v547
    %550 = vrot.lane.b32.xlu0 %v548, 64
    %v551 = vpop.permute.xlu0 %550
    %v553 = vmul.f32 %v536, %v551
    %555 = vrot.lane.b32.xlu0 %v553, 32
    %v556 = vpop.permute.xlu0 %555
    %559 = vrot.lane.b32.xlu0 %v532, 64
    %v560 = vpop.permute.xlu0 %559
    %v562 = vsel %vm95, %v556, %v560
    %v564 = vsel %vm308, %v562, 0
    %566 = vmatprep.subr.mxu0 0.0
    %567 = vmatpush1.msra.mxu0 0.0
    %568 = vmatprep.subr.mxu0 0.0
    %569 = vmatpush1.msra.mxu0 0.0
    %570 = vmatprep.subr.mxu0 0.0
    %571 = vmatpush1.msra.mxu0 0.0
    %572 = vmatprep.subr.mxu0 0.0
    %573 = vmatpush1.msra.mxu0 0.0
    %574 = vmatprep.subr.mxu0 0.0
    %575 = vmatpush1.msra.mxu0 0.0
    %576 = vmatprep.subr.mxu0 0.0
    %577 = vmatpush1.msra.mxu0 0.0
    %578 = vmatprep.subr.mxu0 0.0
    %579 = vmatpush1.msra.mxu0 0.0
    %580 = vmatprep.subr.mxu0 0.0
    %581 = vmatpush1.msra.mxu0 0.0
    %582 = vmatprep.subr.mxu0 %v75
    %583 = vmatpush1.msra.mxu0 %v74
    %584 = vmatprep.subr.mxu0 %v73
    %585 = vmatpush1.msra.mxu0 %v72
    %586 = vmatprep.subr.mxu0 %v71
    %587 = vmatpush1.msra.mxu0 %v70
    %588 = vmatprep.subr.mxu0 %v69
    %589 = vmatpush1.msra.mxu0 %v68
    %590 = vmatprep.subr.mxu0 %v67
    %591 = vmatpush1.msra.mxu0 %v66
    %592 = vmatprep.subr.mxu0 %v65
    %593 = vmatpush1.msra.mxu0 %v64
    %594 = vmatprep.subr.mxu0 %v63
    %595 = vmatpush1.msra.mxu0 %v62
    %596 = vmatprep.subr.mxu0 %v61
    %597 = vmatpush1.msra.mxu0 %v60
    %598 = vmatprep.subr.mxu0 0.0
    %599 = vmatpush2.msra.mxu0 0.0
    %600 = vmatprep.subr.mxu0 0.0
    %601 = vmatpush2.msra.mxu0 0.0
    %602 = vmatprep.subr.mxu0 0.0
    %603 = vmatpush2.msra.mxu0 0.0
    %604 = vmatprep.subr.mxu0 0.0
    %605 = vmatpush2.msra.mxu0 0.0
    %606 = vmatprep.subr.mxu0 0.0
    %607 = vmatpush2.msra.mxu0 0.0
    %608 = vmatprep.subr.mxu0 0.0
    %609 = vmatpush2.msra.mxu0 0.0
    %610 = vmatprep.subr.mxu0 0.0
    %611 = vmatpush2.msra.mxu0 0.0
    %612 = vmatprep.subr.mxu0 0.0
    %613 = vmatpush2.msra.mxu0 0.0
    %614 = vmatprep.subr.mxu0 0.0
    %615 = vmatpush2.msra.mxu0 0.0
    %616 = vmatprep.subr.mxu0 0.0
    %617 = vmatpush2.msra.mxu0 0.0
    %618 = vmatprep.subr.mxu0 0.0
    %619 = vmatpush2.msra.mxu0 0.0
    %620 = vmatprep.subr.mxu0 0.0
    %621 = vmatpush2.msra.mxu0 0.0
    %622 = vmatprep.subr.mxu0 0.0
    %623 = vmatpush2.msra.mxu0 0.0
    %624 = vmatprep.subr.mxu0 0.0
    %625 = vmatpush2.msra.mxu0 0.0
    %626 = vmatprep.subr.mxu0 0.0
    %627 = vmatpush2.msra.mxu0 0.0
    %628 = vmatprep.subr.mxu0 0.0
    %629 = vmatpush2.msra.mxu0 0.0
    %630 = vmatprep.mubr.f32.mxu0 0.0
    %631 = vmatmul.mubr.f32.gmra.mxu0 %v564
    %v632 = vpop.f32.mrf.mxu0
    %v633 = vadd.f32 0.0, %v632
    %v634 = vpop.f32.mrf.mxu0
    %v635 = vadd.f32 0.0, %v634
    %636 = vdwg.mxu0
    %v637 = vadd.f32 %v633, %v81
    %v638 = vtanh.pop %v637
    %v639 = vmul.f32 %v638, 0.5
    %v640 = vadd.f32 %v639, 0.5
    %v641 = vmul.f32 %v640, %v526
    %643 = vrot.lane.b32.xlu0 %v638, 64
    %v644 = vpop.permute.xlu0 %643
    %v646 = vmul.f32 %v640, %v644
    %648 = vrot.lane.b32.xlu0 %v646, 32
    %v649 = vpop.permute.xlu0 %648
    %v651 = vadd.f32 %v641, %v649
    %v652 = vtanh.pop %v651
    %654 = vrot.lane.b32.xlu0 %v652, 64
    %v655 = vpop.permute.xlu0 %654
    %v657 = vmul.f32 %v640, %v655
    %v658 = vadd.f32 %v166, %v635
    %v659 = vtanh.pop %v658
    %v660 = vmul.f32 %v659, 0.5
    %v661 = vadd.f32 %v660, 0.5
    %v662 = vmul.f32 %v661, %v547
    %664 = vrot.lane.b32.xlu0 %v659, 64
    %v665 = vpop.permute.xlu0 %664
    %v667 = vmul.f32 %v661, %v665
    %669 = vrot.lane.b32.xlu0 %v667, 32
    %v670 = vpop.permute.xlu0 %669
    %v672 = vadd.f32 %v662, %v670
    %v673 = vtanh.pop %v672
    %675 = vrot.lane.b32.xlu0 %v673, 64
    %v676 = vpop.permute.xlu0 %675
    %v678 = vmul.f32 %v661, %v676
    %680 = vrot.lane.b32.xlu0 %v678, 32
    %v681 = vpop.permute.xlu0 %680
    %684 = vrot.lane.b32.xlu0 %v657, 64
    %v685 = vpop.permute.xlu0 %684
    %v687 = vsel %vm95, %v681, %v685
    %v689 = vsel %vm308, %v687, 0
    %691 = vmatprep.subr.mxu0 0.0
    %692 = vmatpush1.msra.mxu0 0.0
    %693 = vmatprep.subr.mxu0 0.0
    %694 = vmatpush1.msra.mxu0 0.0
    %695 = vmatprep.subr.mxu0 0.0
    %696 = vmatpush1.msra.mxu0 0.0
    %697 = vmatprep.subr.mxu0 0.0
    %698 = vmatpush1.msra.mxu0 0.0
    %699 = vmatprep.subr.mxu0 0.0
    %700 = vmatpush1.msra.mxu0 0.0
    %701 = vmatprep.subr.mxu0 0.0
    %702 = vmatpush1.msra.mxu0 0.0
    %703 = vmatprep.subr.mxu0 0.0
    %704 = vmatpush1.msra.mxu0 0.0
    %705 = vmatprep.subr.mxu0 0.0
    %706 = vmatpush1.msra.mxu0 0.0
    %707 = vmatprep.subr.mxu0 %v75
    %708 = vmatpush1.msra.mxu0 %v74
    %709 = vmatprep.subr.mxu0 %v73
    %710 = vmatpush1.msra.mxu0 %v72
    %711 = vmatprep.subr.mxu0 %v71
    %712 = vmatpush1.msra.mxu0 %v70
    %713 = vmatprep.subr.mxu0 %v69
    %714 = vmatpush1.msra.mxu0 %v68
    %715 = vmatprep.subr.mxu0 %v67
    %716 = vmatpush1.msra.mxu0 %v66
    %717 = vmatprep.subr.mxu0 %v65
    %718 = vmatpush1.msra.mxu0 %v64
    %719 = vmatprep.subr.mxu0 %v63
    %720 = vmatpush1.msra.mxu0 %v62
    %721 = vmatprep.subr.mxu0 %v61
    %722 = vmatpush1.msra.mxu0 %v60
    %723 = vmatprep.subr.mxu0 0.0
    %724 = vmatpush2.msra.mxu0 0.0
    %725 = vmatprep.subr.mxu0 0.0
    %726 = vmatpush2.msra.mxu0 0.0
    %727 = vmatprep.subr.mxu0 0.0
    %728 = vmatpush2.msra.mxu0 0.0
    %729 = vmatprep.subr.mxu0 0.0
    %730 = vmatpush2.msra.mxu0 0.0
    %731 = vmatprep.subr.mxu0 0.0
    %732 = vmatpush2.msra.mxu0 0.0
    %733 = vmatprep.subr.mxu0 0.0
    %734 = vmatpush2.msra.mxu0 0.0
    %735 = vmatprep.subr.mxu0 0.0
    %736 = vmatpush2.msra.mxu0 0.0
    %737 = vmatprep.subr.mxu0 0.0
    %738 = vmatpush2.msra.mxu0 0.0
    %739 = vmatprep.subr.mxu0 0.0
    %740 = vmatpush2.msra.mxu0 0.0
    %741 = vmatprep.subr.mxu0 0.0
    %742 = vmatpush2.msra.mxu0 0.0
    %743 = vmatprep.subr.mxu0 0.0
    %744 = vmatpush2.msra.mxu0 0.0
    %745 = vmatprep.subr.mxu0 0.0
    %746 = vmatpush2.msra.mxu0 0.0
    %747 = vmatprep.subr.mxu0 0.0
    %748 = vmatpush2.msra.mxu0 0.0
    %749 = vmatprep.subr.mxu0 0.0
    %750 = vmatpush2.msra.mxu0 0.0
    %751 = vmatprep.subr.mxu0 0.0
    %752 = vmatpush2.msra.mxu0 0.0
    %753 = vmatprep.subr.mxu0 0.0
    %754 = vmatpush2.msra.mxu0 0.0
    %755 = vmatprep.mubr.f32.mxu0 0.0
    %756 = vmatmul.mubr.f32.gmra.mxu0 %v689
    %v757 = vpop.f32.mrf.mxu0
    %v758 = vadd.f32 0.0, %v757
    %v759 = vpop.f32.mrf.mxu0
    %v760 = vadd.f32 0.0, %v759
    %761 = vdwg.mxu0
    %v762 = vadd.f32 %v758, %v81
    %v763 = vtanh.pop %v762
    %v764 = vmul.f32 %v763, 0.5
    %v765 = vadd.f32 %v764, 0.5
    %v766 = vmul.f32 %v765, %v651
    %768 = vrot.lane.b32.xlu0 %v763, 64
    %v769 = vpop.permute.xlu0 %768
    %v771 = vmul.f32 %v765, %v769
    %773 = vrot.lane.b32.xlu0 %v771, 32
    %v774 = vpop.permute.xlu0 %773
    %v776 = vadd.f32 %v766, %v774
    %v777 = vtanh.pop %v776
    %779 = vrot.lane.b32.xlu0 %v777, 64
    %v780 = vpop.permute.xlu0 %779
    %v782 = vmul.f32 %v765, %v780
    %v783 = vadd.f32 %v166, %v760
    %v784 = vtanh.pop %v783
    %v785 = vmul.f32 %v784, 0.5
    %v786 = vadd.f32 %v785, 0.5
    %v787 = vmul.f32 %v786, %v672
    %789 = vrot.lane.b32.xlu0 %v784, 64
    %v790 = vpop.permute.xlu0 %789
    %v792 = vmul.f32 %v786, %v790
    %794 = vrot.lane.b32.xlu0 %v792, 32
    %v795 = vpop.permute.xlu0 %794
    %v797 = vadd.f32 %v787, %v795
    %v798 = vtanh.pop %v797
    %800 = vrot.lane.b32.xlu0 %v798, 64
    %v801 = vpop.permute.xlu0 %800
    %v803 = vmul.f32 %v786, %v801
    %805 = vrot.lane.b32.xlu0 %v803, 32
    %v806 = vpop.permute.xlu0 %805
    %809 = vrot.lane.b32.xlu0 %v782, 64
    %v810 = vpop.permute.xlu0 %809
    %v812 = vsel %vm95, %v806, %v810
    %v814 = vsel %vm308, %v812, 0
    %816 = vmatprep.subr.mxu0 0.0
    %817 = vmatpush1.msra.mxu0 0.0
    %818 = vmatprep.subr.mxu0 0.0
    %819 = vmatpush1.msra.mxu0 0.0
    %820 = vmatprep.subr.mxu0 0.0
    %821 = vmatpush1.msra.mxu0 0.0
    %822 = vmatprep.subr.mxu0 0.0
    %823 = vmatpush1.msra.mxu0 0.0
    %824 = vmatprep.subr.mxu0 0.0
    %825 = vmatpush1.msra.mxu0 0.0
    %826 = vmatprep.subr.mxu0 0.0
    %827 = vmatpush1.msra.mxu0 0.0
    %828 = vmatprep.subr.mxu0 0.0
    %829 = vmatpush1.msra.mxu0 0.0
    %830 = vmatprep.subr.mxu0 0.0
    %831 = vmatpush1.msra.mxu0 0.0
    %832 = vmatprep.subr.mxu0 %v75
    %833 = vmatpush1.msra.mxu0 %v74
    %834 = vmatprep.subr.mxu0 %v73
    %835 = vmatpush1.msra.mxu0 %v72
    %836 = vmatprep.subr.mxu0 %v71
    %837 = vmatpush1.msra.mxu0 %v70
    %838 = vmatprep.subr.mxu0 %v69
    %839 = vmatpush1.msra.mxu0 %v68
    %840 = vmatprep.subr.mxu0 %v67
    %841 = vmatpush1.msra.mxu0 %v66
    %842 = vmatprep.subr.mxu0 %v65
    %843 = vmatpush1.msra.mxu0 %v64
    %844 = vmatprep.subr.mxu0 %v63
    %845 = vmatpush1.msra.mxu0 %v62
    %846 = vmatprep.subr.mxu0 %v61
    %847 = vmatpush1.msra.mxu0 %v60
    %848 = vmatprep.subr.mxu0 0.0
    %849 = vmatpush2.msra.mxu0 0.0
    %850 = vmatprep.subr.mxu0 0.0
    %851 = vmatpush2.msra.mxu0 0.0
    %852 = vmatprep.subr.mxu0 0.0
    %853 = vmatpush2.msra.mxu0 0.0
    %854 = vmatprep.subr.mxu0 0.0
    %855 = vmatpush2.msra.mxu0 0.0
    %856 = vmatprep.subr.mxu0 0.0
    %857 = vmatpush2.msra.mxu0 0.0
    %858 = vmatprep.subr.mxu0 0.0
    %859 = vmatpush2.msra.mxu0 0.0
    %860 = vmatprep.subr.mxu0 0.0
    %861 = vmatpush2.msra.mxu0 0.0
    %862 = vmatprep.subr.mxu0 0.0
    %863 = vmatpush2.msra.mxu0 0.0
    %864 = vmatprep.subr.mxu0 0.0
    %865 = vmatpush2.msra.mxu0 0.0
    %866 = vmatprep.subr.mxu0 0.0
    %867 = vmatpush2.msra.mxu0 0.0
    %868 = vmatprep.subr.mxu0 0.0
    %869 = vmatpush2.msra.mxu0 0.0
    %870 = vmatprep.subr.mxu0 0.0
    %871 = vmatpush2.msra.mxu0 0.0
    %872 = vmatprep.subr.mxu0 0.0
    %873 = vmatpush2.msra.mxu0 0.0
    %874 = vmatprep.subr.mxu0 0.0
    %875 = vmatpush2.msra.mxu0 0.0
    %876 = vmatprep.subr.mxu0 0.0
    %877 = vmatpush2.msra.mxu0 0.0
    %878 = vmatprep.subr.mxu0 0.0
    %879 = vmatpush2.msra.mxu0 0.0
    %880 = vmatprep.mubr.f32.mxu0 0.0
    %881 = vmatmul.mubr.f32.gmra.mxu0 %v814
    %v882 = vpop.f32.mrf.mxu0
    %v883 = vadd.f32 0.0, %v882
    %v884 = vpop.f32.mrf.mxu0
    %v885 = vadd.f32 0.0, %v884
    %886 = vdwg.mxu0
    %v887 = vadd.f32 %v883, %v81
    %v888 = vtanh.pop %v887
    %v889 = vmul.f32 %v888, 0.5
    %v890 = vadd.f32 %v889, 0.5
    %v891 = vmul.f32 %v890, %v776
    %893 = vrot.lane.b32.xlu0 %v888, 64
    %v894 = vpop.permute.xlu0 %893
    %v896 = vmul.f32 %v890, %v894
    %898 = vrot.lane.b32.xlu0 %v896, 32
    %v899 = vpop.permute.xlu0 %898
    %v901 = vadd.f32 %v891, %v899
    %v902 = vtanh.pop %v901
    %904 = vrot.lane.b32.xlu0 %v902, 64
    %v905 = vpop.permute.xlu0 %904
    %v907 = vmul.f32 %v890, %v905
    %v908 = vadd.f32 %v166, %v885
    %v909 = vtanh.pop %v908
    %v910 = vmul.f32 %v909, 0.5
    %v911 = vadd.f32 %v910, 0.5
    %v912 = vmul.f32 %v911, %v797
    %914 = vrot.lane.b32.xlu0 %v909, 64
    %v915 = vpop.permute.xlu0 %914
    %v917 = vmul.f32 %v911, %v915
    %919 = vrot.lane.b32.xlu0 %v917, 32
    %v920 = vpop.permute.xlu0 %919
    %v922 = vadd.f32 %v912, %v920
    %v923 = vtanh.pop %v922
    %925 = vrot.lane.b32.xlu0 %v923, 64
    %v926 = vpop.permute.xlu0 %925
    %v928 = vmul.f32 %v911, %v926
    %930 = vrot.lane.b32.xlu0 %v928, 32
    %v931 = vpop.permute.xlu0 %930
    %934 = vrot.lane.b32.xlu0 %v907, 64
    %v935 = vpop.permute.xlu0 %934
    %v937 = vsel %vm95, %v931, %v935
    %v939 = vsel %vm308, %v937, 0
    %941 = vmatprep.subr.mxu0 0.0
    %942 = vmatpush1.msra.mxu0 0.0
    %943 = vmatprep.subr.mxu0 0.0
    %944 = vmatpush1.msra.mxu0 0.0
    %945 = vmatprep.subr.mxu0 0.0
    %946 = vmatpush1.msra.mxu0 0.0
    %947 = vmatprep.subr.mxu0 0.0
    %948 = vmatpush1.msra.mxu0 0.0
    %949 = vmatprep.subr.mxu0 0.0
    %950 = vmatpush1.msra.mxu0 0.0
    %951 = vmatprep.subr.mxu0 0.0
    %952 = vmatpush1.msra.mxu0 0.0
    %953 = vmatprep.subr.mxu0 0.0
    %954 = vmatpush1.msra.mxu0 0.0
    %955 = vmatprep.subr.mxu0 0.0
    %956 = vmatpush1.msra.mxu0 0.0
    %957 = vmatprep.subr.mxu0 %v75
    %958 = vmatpush1.msra.mxu0 %v74
    %959 = vmatprep.subr.mxu0 %v73
    %960 = vmatpush1.msra.mxu0 %v72
    %961 = vmatprep.subr.mxu0 %v71
    %962 = vmatpush1.msra.mxu0 %v70
    %963 = vmatprep.subr.mxu0 %v69
    %964 = vmatpush1.msra.mxu0 %v68
    %965 = vmatprep.subr.mxu0 %v67
    %966 = vmatpush1.msra.mxu0 %v66
    %967 = vmatprep.subr.mxu0 %v65
    %968 = vmatpush1.msra.mxu0 %v64
    %969 = vmatprep.subr.mxu0 %v63
    %970 = vmatpush1.msra.mxu0 %v62
    %971 = vmatprep.subr.mxu0 %v61
    %972 = vmatpush1.msra.mxu0 %v60
    %973 = vmatprep.subr.mxu0 0.0
    %974 = vmatpush2.msra.mxu0 0.0
    %975 = vmatprep.subr.mxu0 0.0
    %976 = vmatpush2.msra.mxu0 0.0
    %977 = vmatprep.subr.mxu0 0.0
    %978 = vmatpush2.msra.mxu0 0.0
    %979 = vmatprep.subr.mxu0 0.0
    %980 = vmatpush2.msra.mxu0 0.0
    %981 = vmatprep.subr.mxu0 0.0
    %982 = vmatpush2.msra.mxu0 0.0
    %983 = vmatprep.subr.mxu0 0.0
    %984 = vmatpush2.msra.mxu0 0.0
    %985 = vmatprep.subr.mxu0 0.0
    %986 = vmatpush2.msra.mxu0 0.0
    %987 = vmatprep.subr.mxu0 0.0
    %988 = vmatpush2.msra.mxu0 0.0
    %989 = vmatprep.subr.mxu0 0.0
    %990 = vmatpush2.msra.mxu0 0.0
    %991 = vmatprep.subr.mxu0 0.0
    %992 = vmatpush2.msra.mxu0 0.0
    %993 = vmatprep.subr.mxu0 0.0
    %994 = vmatpush2.msra.mxu0 0.0
    %995 = vmatprep.subr.mxu0 0.0
    %996 = vmatpush2.msra.mxu0 0.0
    %997 = vmatprep.subr.mxu0 0.0
    %998 = vmatpush2.msra.mxu0 0.0
    %999 = vmatprep.subr.mxu0 0.0
    %1000 = vmatpush2.msra.mxu0 0.0
    %1001 = vmatprep.subr.mxu0 0.0
    %1002 = vmatpush2.msra.mxu0 0.0
    %1003 = vmatprep.subr.mxu0 0.0
    %1004 = vmatpush2.msra.mxu0 0.0
    %1005 = vmatprep.mubr.f32.mxu0 0.0
    %1006 = vmatmul.mubr.f32.gmra.mxu0 %v939
    %v1007 = vpop.f32.mrf.mxu0
    %v1008 = vadd.f32 0.0, %v1007
    %v1009 = vpop.f32.mrf.mxu0
    %v1010 = vadd.f32 0.0, %v1009
    %1011 = vdwg.mxu0
    %v1012 = vadd.f32 %v1008, %v81
    %v1013 = vtanh.pop %v1012
    %v1014 = vmul.f32 %v1013, 0.5
    %v1015 = vadd.f32 %v1014, 0.5
    %v1016 = vmul.f32 %v1015, %v901
    %1018 = vrot.lane.b32.xlu0 %v1013, 64
    %v1019 = vpop.permute.xlu0 %1018
    %v1021 = vmul.f32 %v1015, %v1019
    %1023 = vrot.lane.b32.xlu0 %v1021, 32
    %v1024 = vpop.permute.xlu0 %1023
    %v1026 = vadd.f32 %v1016, %v1024
    %v1027 = vtanh.pop %v1026
    %1029 = vrot.lane.b32.xlu0 %v1027, 64
    %v1030 = vpop.permute.xlu0 %1029
    %v1032 = vmul.f32 %v1015, %v1030
    %v1033 = vadd.f32 %v166, %v1010
    %v1034 = vtanh.pop %v1033
    %v1035 = vmul.f32 %v1034, 0.5
    %v1036 = vadd.f32 %v1035, 0.5
    %v1037 = vmul.f32 %v1036, %v922
    %1039 = vrot.lane.b32.xlu0 %v1034, 64
    %v1040 = vpop.permute.xlu0 %1039
    %v1042 = vmul.f32 %v1036, %v1040
    %1044 = vrot.lane.b32.xlu0 %v1042, 32
    %v1045 = vpop.permute.xlu0 %1044
    %v1047 = vadd.f32 %v1037, %v1045
    %v1048 = vtanh.pop %v1047
    %1050 = vrot.lane.b32.xlu0 %v1048, 64
    %v1051 = vpop.permute.xlu0 %1050
    %v1053 = vmul.f32 %v1036, %v1051
    %1055 = vrot.lane.b32.xlu0 %v1053, 32
    %v1056 = vpop.permute.xlu0 %1055
    %1059 = vrot.lane.b32.xlu0 %v1032, 64
    %v1060 = vpop.permute.xlu0 %1059
    %v1062 = vsel %vm95, %v1056, %v1060
    %v1064 = vsel %vm308, %v1062, 0
    %1066 = vmatprep.subr.mxu0 0.0
    %1067 = vmatpush1.msra.mxu0 0.0
    %1068 = vmatprep.subr.mxu0 0.0
    %1069 = vmatpush1.msra.mxu0 0.0
    %1070 = vmatprep.subr.mxu0 0.0
    %1071 = vmatpush1.msra.mxu0 0.0
    %1072 = vmatprep.subr.mxu0 0.0
    %1073 = vmatpush1.msra.mxu0 0.0
    %1074 = vmatprep.subr.mxu0 0.0
    %1075 = vmatpush1.msra.mxu0 0.0
    %1076 = vmatprep.subr.mxu0 0.0
    %1077 = vmatpush1.msra.mxu0 0.0
    %1078 = vmatprep.subr.mxu0 0.0
    %1079 = vmatpush1.msra.mxu0 0.0
    %1080 = vmatprep.subr.mxu0 0.0
    %1081 = vmatpush1.msra.mxu0 0.0
    %1082 = vmatprep.subr.mxu0 0.0
    %1083 = vmatpush1.msra.mxu0 %v74
    %1084 = vmatprep.subr.mxu0 0.0
    %1085 = vmatpush1.msra.mxu0 %v72
    %1086 = vmatprep.subr.mxu0 0.0
    %1087 = vmatpush1.msra.mxu0 %v70
    %1088 = vmatprep.subr.mxu0 0.0
    %1089 = vmatpush1.msra.mxu0 %v68
    %1090 = vmatprep.subr.mxu0 0.0
    %1091 = vmatpush1.msra.mxu0 %v66
    %1092 = vmatprep.subr.mxu0 0.0
    %1093 = vmatpush1.msra.mxu0 %v64
    %1094 = vmatprep.subr.mxu0 0.0
    %1095 = vmatpush1.msra.mxu0 %v62
    %1096 = vmatprep.subr.mxu0 0.0
    %1097 = vmatpush1.msra.mxu0 %v60
    %1098 = vmatprep.subr.mxu0 0.0
    %1099 = vmatpush2.msra.mxu0 0.0
    %1100 = vmatprep.subr.mxu0 0.0
    %1101 = vmatpush2.msra.mxu0 0.0
    %1102 = vmatprep.subr.mxu0 0.0
    %1103 = vmatpush2.msra.mxu0 0.0
    %1104 = vmatprep.subr.mxu0 0.0
    %1105 = vmatpush2.msra.mxu0 0.0
    %1106 = vmatprep.subr.mxu0 0.0
    %1107 = vmatpush2.msra.mxu0 0.0
    %1108 = vmatprep.subr.mxu0 0.0
    %1109 = vmatpush2.msra.mxu0 0.0
    %1110 = vmatprep.subr.mxu0 0.0
    %1111 = vmatpush2.msra.mxu0 0.0
    %1112 = vmatprep.subr.mxu0 0.0
    %1113 = vmatpush2.msra.mxu0 0.0
    %1114 = vmatprep.subr.mxu0 0.0
    %1115 = vmatpush2.msra.mxu0 0.0
    %1116 = vmatprep.subr.mxu0 0.0
    %1117 = vmatpush2.msra.mxu0 0.0
    %1118 = vmatprep.subr.mxu0 0.0
    %1119 = vmatpush2.msra.mxu0 0.0
    %1120 = vmatprep.subr.mxu0 0.0
    %1121 = vmatpush2.msra.mxu0 0.0
    %1122 = vmatprep.subr.mxu0 0.0
    %1123 = vmatpush2.msra.mxu0 0.0
    %1124 = vmatprep.subr.mxu0 0.0
    %1125 = vmatpush2.msra.mxu0 0.0
    %1126 = vmatprep.subr.mxu0 0.0
    %1127 = vmatpush2.msra.mxu0 0.0
    %1128 = vmatprep.subr.mxu0 0.0
    %1129 = vmatpush2.msra.mxu0 0.0
    %1130 = vmatprep.mubr.f32.mxu0 0.0
    %1131 = vmatmul.mubr.f32.gmra.mxu0 %v1064
    %v1132 = vpop.f32.mrf.mxu0
    %v1133 = vadd.f32 %v81, %v1132
    %v1134 = vpop.f32.mrf.mxu0
    %1135 = vdwg.mxu0
    %v1136 = vtanh.pop %v1133
    %v1137 = vmul.f32 %v1136, 0.5
    %v1138 = vadd.f32 %v1137, 0.5
    %v1139 = vmul.f32 %v1138, %v1026
    %1141 = vrot.lane.b32.xlu0 %v1136, 64
    %v1142 = vpop.permute.xlu0 %1141
    %v1144 = vmul.f32 %v1138, %v1142
    %1146 = vrot.lane.b32.xlu0 %v1144, 32
    %v1147 = vpop.permute.xlu0 %1146
    %v1149 = vadd.f32 %v1139, %v1147
    %v1150 = vtanh.pop %v1149
    %1152 = vrot.lane.b32.xlu0 %v1150, 64
    %v1153 = vpop.permute.xlu0 %1152
    %v1155 = vmul.f32 %v1138, %v1153
    %1156 = vrot.lane.b32.xlu0 %v273, 32
    %v1157 = vpop.permute.xlu0 %1156
    %1159 = vrot.lane.b32.xlu0 %v532, 96
    %v1160 = vpop.permute.xlu0 %1159
    %1162 = vrot.lane.b32.xlu0 %v782, 32
    %v1163 = vpop.permute.xlu0 %1162
    %1165 = vrot.lane.b32.xlu0 %v1032, 96
    %v1166 = vpop.permute.xlu0 %1165
    %v1168 = vsel %vm95, %v1157, %v435
    %v1169 = vsel %vm308, %v1168, %v1160
    %vm1170 = vcmask 785408
    %v1171 = vsel %vm1170, %v1169, %v657
    %v1172 = vsel %vm95, %v1163, %v935
    %v1173 = vsel %vm308, %v1172, %v1166
    %v1174 = vsel %vm1170, %v1173, %v1155
    %1175 = vst [vmem:[#allocation8] sm:$0xff] %v1171
    %1176 = vst [vmem:[#allocation8 + $0x8] sm:$0xff] %v1174
    // Predicated region
    $region34: #{tpu_custom_call.1} parent=1 // pred_check
      _
    $region35: #{tpu_custom_call.1} parent=1 // pred_check_branch
      %1178 = sbr.rel (0) target = $region37
    $region36: #{tpu_custom_call.1} parent=1 // pred_region
      %s1180 = ssub.s32 256, 256
      %1181 = vsyncadd [#allocation4], %s1180
      %s1183 = sshll.u32 [#allocation8], 4
      %s1184 = int_to_ptr.vmem [resolvable:$true] %s1183
      %1186 = dma.vmem_to_hbm [thread:$0]  %s1184, 256, %s5, [#allocation4]
    $region37: #{tpu_custom_call.1} parent=1 // pred_fallthru
      _
    // Predicated region
    $region38: #{tpu_custom_call.1} parent=1 // pred_check
      _
    $region39: #{tpu_custom_call.1} parent=1 // pred_check_branch
      %1188 = sbr.rel (0) target = $region41
    $region40: #{tpu_custom_call.1} parent=1 // pred_region
      %1189 = dma.done [#allocation4], 256
    $region41: #{tpu_custom_call.1} parent=1 // pred_fallthru
      _
    %1190 = vsyncpa [#allocation3], 1
    %1191 = vsyncpa [#allocation6], 1
    %1192 = vsyncpa [#allocation4], 1

</llo_original>
